<compile_context>
chip_gen: v5e
topology: v5e:2x2
jax: 0.10.0
libtpu: 0.0.40
codegen_flags: <defaults>
</compile_context>

<pallas_src>
import functools

import jax
import jax.numpy as jnp
from jax.experimental import pallas as pl
from jax.experimental.pallas import tpu as pltpu

# ----------------------------- hyper-parameters -----------------------------
EPS         = 1e-8     # Glob eps
BETA        = 0.5      # Glob beta
N_LAYERS    = 2        # Glob n_layers
PHI_DIM     = 32       # kwargs['phi_dim']
D_MODEL     = 32       # transformer d_model (small for the demo)
NUM_TLAYERS = 2        # transformer num_layers
NUM_HEADS   = 4        # transformer num_heads (multi_query)
HEAD_DIM    = D_MODEL // NUM_HEADS
FFN_DIM     = 2 * D_MODEL


def _round_up(x, m):
    return ((x + m - 1) // m) * m


def _vmem_capacity_bytes():
    try:
        return int(pltpu.get_tpu_info().vmem_capacity_bytes)
    except Exception:
        return 64 * 1024 * 1024          # conservative (v7x-sized) fallback


def _pick_edge_tile(E, N):
    """Per-generation VMEM-aware edge-tile (TE) selection."""
    cap = _vmem_capacity_bytes()                       # 128 MiB v5e/v6e, 64 MiB v7x
    vmem_limit = int(min((cap * 3) // 4, 100 * 1024 * 1024))

    # per-step live bytes ~ 24*N per edge (bf16 one-hots + f32 gathered rows,
    # double-buffered inputs) + 4*N^2 for the double-buffered bf16 A^T block.
    budget = int(0.6 * vmem_limit) - 4 * N * N
    if budget > 24 * N * 128:
        te_cap = max(128, min(1024, (budget // (24 * N)) // 128 * 128))
    else:
        te_cap = 128                                   # very large N: minimal tile

    if E <= 128:                                       # single small tile == full array
        TE = _round_up(max(E, 1), 8)
        return TE, TE, vmem_limit

    E_pad128 = _round_up(E, 128)
    TE = min(te_cap, E_pad128)
    # Guarantee >=2 edge tiles when possible so the "parallel" edge axis spans
    # both TensorCores on v7x (harmless 0.35us/step overhead on 1-TC parts).
    if E_pad128 >= 256:
        TE = min(TE, max(128, ((E_pad128 // 2) // 128) * 128))
    return TE, _round_up(E, TE), vmem_limit


# =============================== fused kernel ================================
def _fused_glob_kernel(scale,
                       srcidx_ref, dstidx_ref, at_ref, nsf_ref,
                       w_in_ref, b_in_ref, w_attn_ref,
                       ln1g_ref, ln1b_ref,
                       wf1_ref, bf1_ref, wf2_ref, bf2_ref,
                       ln2g_ref, ln2b_ref,
                       w_out_ref, b_out_ref,
                       p1w1_ref, p1b1_ref, p1w2_ref, p1b2_ref,
                       p2w1_ref, p2b1_ref, p2w2_ref, p2b2_ref,
                       out_ref, acc_ref):
    """One edge tile x one (lid1, lid2) pair; pair axis is the reduction axis.

    Edges-on-lanes layout: every per-edge tensor is [*, TE] with TE on lanes.
    """
    pair = pl.program_id(1)

    @pl.when(pair == 0)
    def _():
        acc_ref[...] = jnp.zeros_like(acc_ref)

    n = at_ref.shape[-1]
    te = srcidx_ref.shape[-1]

    # ---- in-kernel row gather via one-hot matmul on the MXU -----------------
    #   gathered^T[n, e] = A[idx[e], n] = sum_m A^T[n, m] * onehot[m, e]
    row_iota = jax.lax.broadcasted_iota(jnp.int32, (n, te), 0)
    sel_src = jnp.where(row_iota == srcidx_ref[...],
                        jnp.float32(1.0), jnp.float32(0.0)).astype(jnp.bfloat16)
    sel_dst = jnp.where(row_iota == dstidx_ref[...],
                        jnp.float32(1.0), jnp.float32(0.0)).astype(jnp.bfloat16)
    at = at_ref[0]                                     # [N, N] bf16  (A^T, exact 0/1)
    nsf = nsf_ref[0]                                   # [N, 1] f32
    src_t = jnp.dot(at, sel_src, preferred_element_type=jnp.float32) * nsf  # [N, TE]
    dst_t = jnp.dot(at, sel_dst, preferred_element_type=jnp.float32) * nsf  # [N, TE]

    # diag(mat_src @ mat_dst^T) == per-edge dot product (reduce over nodes)
    out_struct = jnp.sum(src_t * dst_t, axis=0, keepdims=True)              # [1, TE]

    # random_fill, eval mode: mat + eps (F.dropout is the identity in eval()).
    # TODO(synk): training-mode random_fill would need pltpu.prng_seed /
    # prng_random_bits; only eval semantics implemented.
    src_f = src_t + EPS
    dst_f = dst_t + EPS
    d_src = jnp.sqrt(jnp.sum(src_f * src_f, axis=0, keepdims=True))         # [1, TE]
    d_dst = jnp.sqrt(jnp.sum(dst_f * dst_f, axis=0, keepdims=True))         # [1, TE]
    x = out_struct / jnp.maximum(d_src * d_dst, 1e-30)                      # [1, TE]

    # ---- transformer encoder (seq len 1): softmax over one key == 1, so Wq/Wk
    # vanish; (I + Wv @ sum_h Wo_h) pre-folded & pre-transposed into w_attn.
    def layer_norm(h, g, b):                           # reduce over feature axis 0
        mu = jnp.mean(h, axis=0, keepdims=True)
        var = jnp.mean((h - mu) ** 2, axis=0, keepdims=True)
        return (h - mu) * jax.lax.rsqrt(var + 1e-5) * g + b

    h = w_in_ref[...] * x + b_in_ref[...]                                   # [D, TE]
    for l in range(NUM_TLAYERS):
        h = layer_norm(
            jnp.dot(w_attn_ref[l], h.astype(jnp.bfloat16),
                    preferred_element_type=jnp.float32),
            ln1g_ref[l], ln1b_ref[l])
        ffn = jnp.maximum(
            jnp.dot(wf1_ref[l], h.astype(jnp.bfloat16),
                    preferred_element_type=jnp.float32) + bf1_ref[l], 0.0)  # [F, TE]
        ffn = jnp.dot(wf2_ref[l], ffn.astype(jnp.bfloat16),
                      preferred_element_type=jnp.float32) + bf2_ref[l]      # [D, TE]
        h = layer_norm(h + ffn, ln2g_ref[l], ln2b_ref[l])
    # output projection d_model -> 1
    y = jnp.sum(h * w_out_ref[...], axis=0, keepdims=True) + b_out_ref[...]  # [1, TE]

    # ---- g_phi1: Linear(1, P) -> ReLU -> Linear(P, 1)
    hp = jnp.maximum(p1w1_ref[...] * y + p1b1_ref[...], 0.0)                # [PHI, TE]
    y = jnp.sum(p1w2_ref[...] * hp, axis=0, keepdims=True) + p1b2_ref[...]  # [1, TE]

    acc_ref[...] += y                                  # beta/lm applied once at the end

    # ---- g_phi2 epilogue, only after the last (lid1, lid2) pair
    @pl.when(pair == pl.num_programs(1) - 1)
    def _():
        s = scale * acc_ref[...]                                            # beta/lm
        hq = jnp.maximum(p2w1_ref[...] * s + p2b1_ref[...], 0.0)
        out_ref[...] = (jnp.sum(p2w2_ref[...] * hq, axis=0, keepdims=True)
                        + p2b2_ref[...])


def fused_glob_layer(at_stack, nsf_stack, src_idx, dst_idx, lm, tp, phi1, phi2):
    """at_stack: [P, N, N] bf16 (A^T per valid pair), nsf_stack: [P, N, 1] f32,
    src_idx / dst_idx: [E] int32 edge endpoints of g_edges[lid1]."""
    P, N, _ = at_stack.shape
    E = int(src_idx.shape[0])

    TE, E_pad, vmem_limit = _pick_edge_tile(E, N)

    # Pad only the tiny index vectors; fill value N -> all-zero one-hot column,
    # so padded edges produce finite garbage that is sliced off below.
    fill = jnp.full((E_pad - E,), N, dtype=jnp.int32)
    src_pad = jnp.concatenate([src_idx.astype(jnp.int32), fill])[None, :]   # [1, E_pad]
    dst_pad = jnp.concatenate([dst_idx.astype(jnp.int32), fill])[None, :]   # [1, E_pad]

    grid = (E_pad // TE, P)
    c2 = lambda i, p: (0, 0)
    c3 = lambda i, p: (0, 0, 0)

    L, D, F, PD = NUM_TLAYERS, D_MODEL, FFN_DIM, PHI_DIM
    in_specs = [
        pl.BlockSpec((1, TE), lambda i, p: (0, i)),          # src edge indices
        pl.BlockSpec((1, TE), lambda i, p: (0, i)),          # dst edge indices
        pl.BlockSpec((1, N, N), lambda i, p: (p, 0, 0)),     # A^T for this pair
        pl.BlockSpec((1, N, 1), lambda i, p: (p, 0, 0)),     # nsf for this pair
        pl.BlockSpec((D, 1), c2), pl.BlockSpec((D, 1), c2),          # w_in, b_in
        pl.BlockSpec((L, D, D), c3),                                  # (I+attn)^T
        pl.BlockSpec((L, D, 1), c3), pl.BlockSpec((L, D, 1), c3),     # ln1 g/b
        pl.BlockSpec((L, F, D), c3), pl.BlockSpec((L, F, 1), c3),     # wf1^T, bf1
        pl.BlockSpec((L, D, F), c3), pl.BlockSpec((L, D, 1), c3),     # wf2^T, bf2
        pl.BlockSpec((L, D, 1), c3), pl.BlockSpec((L, D, 1), c3),     # ln2 g/b
        pl.BlockSpec((D, 1), c2), pl.BlockSpec((1, 1), c2),           # w_out, b_out
        pl.BlockSpec((PD, 1), c2), pl.BlockSpec((PD, 1), c2),         # phi1 w1, b1
        pl.BlockSpec((PD, 1), c2), pl.BlockSpec((1, 1), c2),          # phi1 w2, b2
        pl.BlockSpec((PD, 1), c2), pl.BlockSpec((PD, 1), c2),         # phi2 w1, b1
        pl.BlockSpec((PD, 1), c2), pl.BlockSpec((1, 1), c2),          # phi2 w2, b2
    ]

    out = pl.pallas_call(
        functools.partial(_fused_glob_kernel, float(BETA) / float(lm)),
        out_shape=jax.ShapeDtypeStruct((1, E_pad), jnp.float32),   # lane-dense output
        grid_spec=pltpu.PrefetchScalarGridSpec(
            num_scalar_prefetch=0,
            grid=grid,
            in_specs=in_specs,
            out_specs=pl.BlockSpec((1, TE), lambda i, p: (0, i)),
            scratch_shapes=[pltpu.VMEM((1, TE), jnp.float32)],
        ),
        compiler_params=pltpu.CompilerParams(
            dimension_semantics=("parallel", "arbitrary"),
            vmem_limit_bytes=vmem_limit),
    )(src_pad, dst_pad, at_stack, nsf_stack,
      tp["w_in"], tp["b_in"], tp["w_attn"],
      tp["ln1g"], tp["ln1b"], tp["wf1"], tp["bf1"],
      tp["wf2"], tp["bf2"], tp["ln2g"], tp["ln2b"],
      tp["w_out"], tp["b_out"],
      phi1["w1"], phi1["b1"], phi1["w2"], phi1["b2"],
      phi2["w1"], phi2["b1"], phi2["w2"], phi2["b2"])
    return out[0, :E][:, None]


# ============================== parameter init ===============================
def init_params(key):
    def lin(k, shape, scale):
        return (scale * jax.random.normal(k, shape)).astype(jnp.float32)

    ks = jax.random.split(key, 2 * N_LAYERS + 1)

    def phi(k):
        k1, k2, k3, k4 = jax.random.split(k, 4)
        return dict(w1=lin(k1, (PHI_DIM, 1), 1.0),
                    b1=lin(k2, (PHI_DIM, 1), 0.1),
                    w2=lin(k3, (PHI_DIM, 1), PHI_DIM ** -0.5),
                    b2=lin(k4, (1, 1), 0.1))

    params = {
        "g_phi1": [phi(ks[i]) for i in range(N_LAYERS)],
        "g_phi2": [phi(ks[N_LAYERS + i]) for i in range(N_LAYERS)],
    }

    kt = jax.random.split(ks[-1], 10)
    L, D, dh, F, H = NUM_TLAYERS, D_MODEL, HEAD_DIM, FFN_DIM, NUM_HEADS

    # Multi-query attention over a length-1 sequence: softmax == 1, so
    # attn = v @ sum_h(Wo head block h); fold Wv@WoSum AND the residual (I + .)
    # at init, store transposed for the edges-on-lanes ([D, TE]) layout.
    wv = lin(kt[2], (L, D, dh), D ** -0.5)
    wo = lin(kt[3], (L, D, D), D ** -0.5)
    wo_sum = wo.reshape(L, H, dh, D).sum(axis=1)                  # [L, dh, D]
    w_attn = jnp.einsum("lij,ljk->lik", wv, wo_sum)               # [L, D, D]
    w_attn_t = jnp.transpose(jnp.eye(D, dtype=jnp.float32)[None] + w_attn,
                             (0, 2, 1))                           # (I + attn)^T

    wf1 = lin(kt[4], (L, D, F), D ** -0.5)
    wf2 = lin(kt[6], (L, F, D), F ** -0.5)

    params["transformer"] = dict(
        w_in=lin(kt[0], (D, 1), 1.0),
        b_in=lin(kt[1], (D, 1), 0.1),
        w_attn=w_attn_t.astype(jnp.bfloat16),                     # MXU operand: bf16
        ln1g=jnp.ones((L, D, 1), jnp.float32),
        ln1b=jnp.zeros((L, D, 1), jnp.float32),
        wf1=jnp.transpose(wf1, (0, 2, 1)).astype(jnp.bfloat16),   # [L, F, D]
        bf1=lin(kt[5], (L, F, 1), 0.1),
        wf2=jnp.transpose(wf2, (0, 2, 1)).astype(jnp.bfloat16),   # [L, D, F]
        bf2=lin(kt[7], (L, D, 1), 0.1),
        ln2g=jnp.ones((L, D, 1), jnp.float32),
        ln2b=jnp.zeros((L, D, 1), jnp.float32),
        w_out=lin(kt[8], (D, 1), D ** -0.5),
        b_out=lin(kt[9], (1, 1), 0.1),
    )
    return params


# ============================= forward orchestration =========================
def _g_phi_ref(x, pp):
    """Plain-JAX g_phi for the degenerate no-valid-pair case (x: [E, 1])."""
    h = jnp.maximum(x @ pp["w1"].T + pp["b1"].T, 0.0)
    return h @ pp["w2"] + pp["b2"]


def glob_forward(adjs, edges_src, edges_dst, out_structs, node_struct_feats, p,
                 params):
    out_structs2 = []
    for lid1 in range(N_LAYERS):
        src_idx = edges_src[lid1]
        dst_idx = edges_dst[lid1]
        E = int(src_idx.shape[0])
        if E <= 0:
            out_structs2.append(None)
            continue
        pol = p[lid1]
        lm = len(pol)
        valid = [lid2 for lid2 in pol
                 if lid2 is not None and lid2 != -1 and lid2 != lid1]
        if not valid:
            out_structs2.append(_g_phi_ref(jnp.zeros_like(out_structs[lid1]),
                                           params["g_phi2"][lid1]))
            continue

        # Plain-JAX glue standing in for DGL merge/to_simple + scipy CSR
        # extraction. Only the small transposed adjacencies ([P, N, N] bf16 —
        # exact for 0/1 entries) and node features ([P, N, 1] f32) hit HBM; the
        # [P, E, N] gathered stacks never materialize (gather runs in-kernel).
        at_stack = jnp.stack([adjs[(lid1, lid2)].T.astype(jnp.bfloat16)
                              for lid2 in valid], axis=0)
        nsf_stack = jnp.stack(
            [0.5 * (node_struct_feats[lid1] + node_struct_feats[lid2])
             for lid2 in valid], axis=0).astype(jnp.float32)

        sl2 = fused_glob_layer(at_stack, nsf_stack, src_idx, dst_idx, lm,
                               params["transformer"],
                               params["g_phi1"][lid1],
                               params["g_phi2"][lid1])
        out_structs2.append(sl2)
    return [o for o in out_structs2 if o is not None]


# ==================================== main ===================================
if __name__ == "__main__":
    key = jax.random.PRNGKey(0)
    kp, ka, kn, ke = jax.random.split(key, 4)

    params = init_params(kp)

    N, E = 128, 8   # nodes in merged graph, edges per Glob layer

    # synthetic merged-graph adjacencies per (lid1, lid2) pair (dense stand-in
    # for the scipy CSR matrices the torch code extracts from DGL)
    adj_keys = jax.random.split(ka, N_LAYERS * N_LAYERS)
    adjs = {}
    for l1 in range(N_LAYERS):
        for l2 in range(N_LAYERS):
            a = (jax.random.uniform(adj_keys[l1 * N_LAYERS + l2], (N, N)) < 0.1)
            adjs[(l1, l2)] = a.astype(jnp.float32)

    nsf_keys = jax.random.split(kn, N_LAYERS)
    node_struct_feats = [jax.random.uniform(nsf_keys[l], (N, 1),
                                            minval=0.1, maxval=1.0)
                         for l in range(N_LAYERS)]

    e_keys = jax.random.split(ke, 2 * N_LAYERS)
    edges_src = [jax.random.randint(e_keys[2 * l], (E,), 0, N)
                 for l in range(N_LAYERS)]
    edges_dst = [jax.random.randint(e_keys[2 * l + 1], (E,), 0, N)
                 for l in range(N_LAYERS)]

    out_structs = [jnp.zeros((E, 1), jnp.float32) for _ in range(N_LAYERS)]
    p = [[1], [0]]   # cross-layer policy: layer 0 pairs with layer 1, and back

    outs = glob_forward(adjs, edges_src, edges_dst, out_structs,
                        node_struct_feats, p, params)
    for o in outs:
        jax.block_until_ready(o)
        assert o.shape == (E, 1) and o.dtype == jnp.float32
        assert bool(jnp.all(jnp.isfinite(o)))
    print("KERNEL_OK")
</pallas_src>

<mosaic_0001>
module attributes {stable_mosaic.version = 11 : i64} {
  func.func @_fused_glob_kernel(%arg0: i32, %arg1: i32, %arg2: memref<1x8xi32, #tpu.memory_space<vmem>>, %arg3: memref<1x8xi32, #tpu.memory_space<vmem>>, %arg4: memref<1x128x128xbf16, #tpu.memory_space<vmem>>, %arg5: memref<1x128x1xf32, #tpu.memory_space<vmem>>, %arg6: memref<32x1xf32, #tpu.memory_space<vmem>>, %arg7: memref<32x1xf32, #tpu.memory_space<vmem>>, %arg8: memref<2x32x32xbf16, #tpu.memory_space<vmem>>, %arg9: memref<2x32x1xf32, #tpu.memory_space<vmem>>, %arg10: memref<2x32x1xf32, #tpu.memory_space<vmem>>, %arg11: memref<2x64x32xbf16, #tpu.memory_space<vmem>>, %arg12: memref<2x64x1xf32, #tpu.memory_space<vmem>>, %arg13: memref<2x32x64xbf16, #tpu.memory_space<vmem>>, %arg14: memref<2x32x1xf32, #tpu.memory_space<vmem>>, %arg15: memref<2x32x1xf32, #tpu.memory_space<vmem>>, %arg16: memref<2x32x1xf32, #tpu.memory_space<vmem>>, %arg17: memref<32x1xf32, #tpu.memory_space<vmem>>, %arg18: memref<1x1xf32, #tpu.memory_space<vmem>>, %arg19: memref<32x1xf32, #tpu.memory_space<vmem>>, %arg20: memref<32x1xf32, #tpu.memory_space<vmem>>, %arg21: memref<32x1xf32, #tpu.memory_space<vmem>>, %arg22: memref<1x1xf32, #tpu.memory_space<vmem>>, %arg23: memref<32x1xf32, #tpu.memory_space<vmem>>, %arg24: memref<32x1xf32, #tpu.memory_space<vmem>>, %arg25: memref<32x1xf32, #tpu.memory_space<vmem>>, %arg26: memref<1x1xf32, #tpu.memory_space<vmem>>, %arg27: memref<1x8xf32, #tpu.memory_space<vmem>>, %arg28: memref<1x8xf32, #tpu.memory_space<vmem>>) attributes {dimension_semantics = [#tpu.dimension_semantics<parallel>, #tpu.dimension_semantics<arbitrary>], iteration_bounds = array<i64: 1, 1>, scalar_prefetch = 0 : i64, scratch_operands = 1 : i64, tpu.core_type = #tpu.core_type<tc>, window_params = [{transform_indices = @transform_0, window_bounds = array<i64: 1, 8>}, {transform_indices = @transform_1, window_bounds = array<i64: 1, 8>}, {transform_indices = @transform_2, window_bounds = array<i64: 1, 128, 128>}, {transform_indices = @transform_3, window_bounds = array<i64: 1, 128, 1>}, {pipeline_mode = #tpu.pipeline_mode<synchronous>, transform_indices = @transform_4, window_bounds = array<i64: 32, 1>}, {pipeline_mode = #tpu.pipeline_mode<synchronous>, transform_indices = @transform_5, window_bounds = array<i64: 32, 1>}, {pipeline_mode = #tpu.pipeline_mode<synchronous>, transform_indices = @transform_6, window_bounds = array<i64: 2, 32, 32>}, {pipeline_mode = #tpu.pipeline_mode<synchronous>, transform_indices = @transform_7, window_bounds = array<i64: 2, 32, 1>}, {pipeline_mode = #tpu.pipeline_mode<synchronous>, transform_indices = @transform_8, window_bounds = array<i64: 2, 32, 1>}, {pipeline_mode = #tpu.pipeline_mode<synchronous>, transform_indices = @transform_9, window_bounds = array<i64: 2, 64, 32>}, {pipeline_mode = #tpu.pipeline_mode<synchronous>, transform_indices = @transform_10, window_bounds = array<i64: 2, 64, 1>}, {pipeline_mode = #tpu.pipeline_mode<synchronous>, transform_indices = @transform_11, window_bounds = array<i64: 2, 32, 64>}, {pipeline_mode = #tpu.pipeline_mode<synchronous>, transform_indices = @transform_12, window_bounds = array<i64: 2, 32, 1>}, {pipeline_mode = #tpu.pipeline_mode<synchronous>, transform_indices = @transform_13, window_bounds = array<i64: 2, 32, 1>}, {pipeline_mode = #tpu.pipeline_mode<synchronous>, transform_indices = @transform_14, window_bounds = array<i64: 2, 32, 1>}, {pipeline_mode = #tpu.pipeline_mode<synchronous>, transform_indices = @transform_15, window_bounds = array<i64: 32, 1>}, {pipeline_mode = #tpu.pipeline_mode<synchronous>, transform_indices = @transform_16, window_bounds = array<i64: 1, 1>}, {pipeline_mode = #tpu.pipeline_mode<synchronous>, transform_indices = @transform_17, window_bounds = array<i64: 32, 1>}, {pipeline_mode = #tpu.pipeline_mode<synchronous>, transform_indices = @transform_18, window_bounds = array<i64: 32, 1>}, {pipeline_mode = #tpu.pipeline_mode<synchronous>, transform_indices = @transform_19, window_bounds = array<i64: 32, 1>}, {pipeline_mode = #tpu.pipeline_mode<synchronous>, transform_indices = @transform_20, window_bounds = array<i64: 1, 1>}, {pipeline_mode = #tpu.pipeline_mode<synchronous>, transform_indices = @transform_21, window_bounds = array<i64: 32, 1>}, {pipeline_mode = #tpu.pipeline_mode<synchronous>, transform_indices = @transform_22, window_bounds = array<i64: 32, 1>}, {pipeline_mode = #tpu.pipeline_mode<synchronous>, transform_indices = @transform_23, window_bounds = array<i64: 32, 1>}, {pipeline_mode = #tpu.pipeline_mode<synchronous>, transform_indices = @transform_24, window_bounds = array<i64: 1, 1>}, {transform_indices = @transform_25, window_bounds = array<i64: 1, 8>}]} {
    %c0_i32 = arith.constant 0 : i32
    %0 = arith.cmpi eq, %arg1, %c0_i32 : i32
    %1 = arith.extui %0 : i1 to i32
    %c0_i32_0 = arith.constant 0 : i32
    %2 = arith.cmpi ne, %1, %c0_i32_0 : i32
    scf.if %2 {
      %cst_127 = arith.constant 0.000000e+00 : f32
      %235 = vector.broadcast %cst_127 : f32 to vector<1x8xf32>
      %c0_128 = arith.constant 0 : index
      %c0_129 = arith.constant 0 : index
      %236 = vector.load %arg28[%c0_128, %c0_129] : memref<1x8xf32, #tpu.memory_space<vmem>>, vector<1x8xf32>
      tpu.vector_store %arg28[%c0_128, %c0_129], %235 {strides = array<i32>} : memref<1x8xf32, #tpu.memory_space<vmem>>, vector<1x8xf32>,
    } else {
    }
    %3 = tpu.iota {dimensions = array<i32: 0>} : vector<128x8xi32>
    %c0 = arith.constant 0 : index
    %c0_1 = arith.constant 0 : index
    %4 = vector.load %arg2[%c0, %c0_1] : memref<1x8xi32, #tpu.memory_space<vmem>>, vector<1x8xi32>
    %5 = vector.broadcast %4 : vector<1x8xi32> to vector<128x8xi32>
    %6 = arith.cmpi eq, %3, %5 : vector<128x8xi32>
    %cst = arith.constant 1.000000e+00 : f32
    %cst_2 = arith.constant 0.000000e+00 : f32
    %7 = vector.broadcast %cst : f32 to vector<128x8xf32>
    %8 = vector.broadcast %cst_2 : f32 to vector<128x8xf32>
    %9 = arith.select %6, %7, %8 : vector<128x8xi1>, vector<128x8xf32>
    %10 = arith.truncf %9 : vector<128x8xf32> to vector<128x8xbf16>
    %c0_3 = arith.constant 0 : index
    %c0_4 = arith.constant 0 : index
    %11 = vector.load %arg3[%c0_3, %c0_4] : memref<1x8xi32, #tpu.memory_space<vmem>>, vector<1x8xi32>
    %12 = vector.broadcast %11 : vector<1x8xi32> to vector<128x8xi32>
    %13 = arith.cmpi eq, %3, %12 : vector<128x8xi32>
    %cst_5 = arith.constant 1.000000e+00 : f32
    %cst_6 = arith.constant 0.000000e+00 : f32
    %14 = vector.broadcast %cst_5 : f32 to vector<128x8xf32>
    %15 = vector.broadcast %cst_6 : f32 to vector<128x8xf32>
    %16 = arith.select %13, %14, %15 : vector<128x8xi1>, vector<128x8xf32>
    %17 = arith.truncf %16 : vector<128x8xf32> to vector<128x8xbf16>
    %c0_7 = arith.constant 0 : index
    %c0_8 = arith.constant 0 : index
    %c0_9 = arith.constant 0 : index
    %18 = vector.load %arg4[%c0_7, %c0_8, %c0_9] : memref<1x128x128xbf16, #tpu.memory_space<vmem>>, vector<1x128x128xbf16>
    %19 = vector.shape_cast %18 : vector<1x128x128xbf16> to vector<128x128xbf16>
    %c0_10 = arith.constant 0 : index
    %c0_11 = arith.constant 0 : index
    %c0_12 = arith.constant 0 : index
    %20 = vector.load %arg5[%c0_10, %c0_11, %c0_12] : memref<1x128x1xf32, #tpu.memory_space<vmem>>, vector<1x128x1xf32>
    %21 = vector.shape_cast %20 : vector<1x128x1xf32> to vector<128x1xf32>
    %cst_13 = arith.constant dense<0.000000e+00> : vector<128x8xf32>
    %22 = tpu.matmul %19, %10, %cst_13 {dimension_numbers = #tpu.dot_dimension_numbers<[1], [0], [0], [1], [0, 0, 1, 1], [], []>} : vector<128x128xbf16>, vector<128x8xbf16>, vector<128x8xf32> -> vector<128x8xf32>
    %23 = vector.broadcast %21 : vector<128x1xf32> to vector<128x8xf32>
    %24 = arith.mulf %22, %23 : vector<128x8xf32>
    %cst_14 = arith.constant dense<0.000000e+00> : vector<128x8xf32>
    %25 = tpu.matmul %19, %17, %cst_14 {dimension_numbers = #tpu.dot_dimension_numbers<[1], [0], [0], [1], [0, 0, 1, 1], [], []>} : vector<128x128xbf16>, vector<128x8xbf16>, vector<128x8xf32> -> vector<128x8xf32>
    %26 = vector.broadcast %21 : vector<128x1xf32> to vector<128x8xf32>
    %27 = arith.mulf %25, %26 : vector<128x8xf32>
    %28 = arith.mulf %24, %27 : vector<128x8xf32>
    %cst_15 = arith.constant dense<0.000000e+00> : vector<8xf32>
    %29 = vector.multi_reduction <add>, %28, %cst_15 [0] : vector<128x8xf32> to vector<8xf32>
    %30 = vector.shape_cast %29 : vector<8xf32> to vector<1x8xf32>
    %cst_16 = arith.constant 9.99999993E-9 : f32
    %31 = vector.broadcast %cst_16 : f32 to vector<128x8xf32>
    %32 = arith.addf %24, %31 : vector<128x8xf32>
    %cst_17 = arith.constant 9.99999993E-9 : f32
    %33 = vector.broadcast %cst_17 : f32 to vector<128x8xf32>
    %34 = arith.addf %27, %33 : vector<128x8xf32>
    %35 = arith.mulf %32, %32 : vector<128x8xf32>
    %cst_18 = arith.constant dense<0.000000e+00> : vector<8xf32>
    %36 = vector.multi_reduction <add>, %35, %cst_18 [0] : vector<128x8xf32> to vector<8xf32>
    %37 = vector.shape_cast %36 : vector<8xf32> to vector<1x8xf32>
    %38 = math.sqrt %37 : vector<1x8xf32>
    %39 = arith.mulf %34, %34 : vector<128x8xf32>
    %cst_19 = arith.constant dense<0.000000e+00> : vector<8xf32>
    %40 = vector.multi_reduction <add>, %39, %cst_19 [0] : vector<128x8xf32> to vector<8xf32>
    %41 = vector.shape_cast %40 : vector<8xf32> to vector<1x8xf32>
    %42 = math.sqrt %41 : vector<1x8xf32>
    %43 = arith.mulf %38, %42 : vector<1x8xf32>
    %cst_20 = arith.constant 1.000000e-30 : f32
    %44 = vector.broadcast %cst_20 : f32 to vector<1x8xf32>
    %45 = arith.maximumf %43, %44 : vector<1x8xf32>
    %46 = arith.divf %30, %45 : vector<1x8xf32>
    %c0_21 = arith.constant 0 : index
    %c0_22 = arith.constant 0 : index
    %47 = vector.load %arg6[%c0_21, %c0_22] : memref<32x1xf32, #tpu.memory_space<vmem>>, vector<32x1xf32>
    %48 = vector.broadcast %47 : vector<32x1xf32> to vector<32x8xf32>
    %49 = vector.broadcast %46 : vector<1x8xf32> to vector<32x8xf32>
    %50 = arith.mulf %48, %49 : vector<32x8xf32>
    %c0_23 = arith.constant 0 : index
    %c0_24 = arith.constant 0 : index
    %51 = vector.load %arg7[%c0_23, %c0_24] : memref<32x1xf32, #tpu.memory_space<vmem>>, vector<32x1xf32>
    %52 = vector.broadcast %51 : vector<32x1xf32> to vector<32x8xf32>
    %53 = arith.addf %50, %52 : vector<32x8xf32>
    %c0_25 = arith.constant 0 : index
    %c0_26 = arith.constant 0 : index
    %c0_27 = arith.constant 0 : index
    %54 = vector.load %arg8[%c0_25, %c0_26, %c0_27] : memref<2x32x32xbf16, #tpu.memory_space<vmem>>, vector<1x32x32xbf16>
    %55 = vector.shape_cast %54 : vector<1x32x32xbf16> to vector<32x32xbf16>
    %56 = arith.truncf %53 : vector<32x8xf32> to vector<32x8xbf16>
    %cst_28 = arith.constant dense<0.000000e+00> : vector<32x8xf32>
    %57 = tpu.matmul %55, %56, %cst_28 {dimension_numbers = #tpu.dot_dimension_numbers<[1], [0], [0], [1], [0, 0, 1, 1], [], []>} : vector<32x32xbf16>, vector<32x8xbf16>, vector<32x8xf32> -> vector<32x8xf32>
    %c0_29 = arith.constant 0 : index
    %c0_30 = arith.constant 0 : index
    %c0_31 = arith.constant 0 : index
    %58 = vector.load %arg9[%c0_29, %c0_30, %c0_31] : memref<2x32x1xf32, #tpu.memory_space<vmem>>, vector<1x32x1xf32>
    %59 = vector.shape_cast %58 : vector<1x32x1xf32> to vector<32x1xf32>
    %c0_32 = arith.constant 0 : index
    %c0_33 = arith.constant 0 : index
    %c0_34 = arith.constant 0 : index
    %60 = vector.load %arg10[%c0_32, %c0_33, %c0_34] : memref<2x32x1xf32, #tpu.memory_space<vmem>>, vector<1x32x1xf32>
    %61 = vector.shape_cast %60 : vector<1x32x1xf32> to vector<32x1xf32>
    %cst_35 = arith.constant dense<0.000000e+00> : vector<8xf32>
    %62 = vector.multi_reduction <add>, %57, %cst_35 [0] : vector<32x8xf32> to vector<8xf32>
    %63 = vector.shape_cast %62 : vector<8xf32> to vector<1x8xf32>
    %cst_36 = arith.constant 3.200000e+01 : f32
    %64 = vector.broadcast %cst_36 : f32 to vector<1x8xf32>
    %65 = arith.divf %63, %64 : vector<1x8xf32>
    %66 = vector.broadcast %65 : vector<1x8xf32> to vector<32x8xf32>
    %67 = arith.subf %57, %66 : vector<32x8xf32>
    %68 = arith.mulf %67, %67 : vector<32x8xf32>
    %cst_37 = arith.constant dense<0.000000e+00> : vector<8xf32>
    %69 = vector.multi_reduction <add>, %68, %cst_37 [0] : vector<32x8xf32> to vector<8xf32>
    %70 = vector.shape_cast %69 : vector<8xf32> to vector<1x8xf32>
    %cst_38 = arith.constant 3.200000e+01 : f32
    %71 = vector.broadcast %cst_38 : f32 to vector<1x8xf32>
    %72 = arith.divf %70, %71 : vector<1x8xf32>
    %73 = vector.broadcast %65 : vector<1x8xf32> to vector<32x8xf32>
    %74 = arith.subf %57, %73 : vector<32x8xf32>
    %cst_39 = arith.constant 9.99999974E-6 : f32
    %75 = vector.broadcast %cst_39 : f32 to vector<1x8xf32>
    %76 = arith.addf %72, %75 : vector<1x8xf32>
    %77 = math.rsqrt %76 : vector<1x8xf32>
    %78 = vector.broadcast %77 : vector<1x8xf32> to vector<32x8xf32>
    %79 = arith.mulf %74, %78 : vector<32x8xf32>
    %80 = vector.broadcast %59 : vector<32x1xf32> to vector<32x8xf32>
    %81 = arith.mulf %79, %80 : vector<32x8xf32>
    %82 = vector.broadcast %61 : vector<32x1xf32> to vector<32x8xf32>
    %83 = arith.addf %81, %82 : vector<32x8xf32>
    %c0_40 = arith.constant 0 : index
    %c0_41 = arith.constant 0 : index
    %c0_42 = arith.constant 0 : index
    %84 = vector.load %arg11[%c0_40, %c0_41, %c0_42] : memref<2x64x32xbf16, #tpu.memory_space<vmem>>, vector<1x64x32xbf16>
    %85 = vector.shape_cast %84 : vector<1x64x32xbf16> to vector<64x32xbf16>
    %86 = arith.truncf %83 : vector<32x8xf32> to vector<32x8xbf16>
    %cst_43 = arith.constant dense<0.000000e+00> : vector<64x8xf32>
    %87 = tpu.matmul %85, %86, %cst_43 {dimension_numbers = #tpu.dot_dimension_numbers<[1], [0], [0], [1], [0, 0, 1, 1], [], []>} : vector<64x32xbf16>, vector<32x8xbf16>, vector<64x8xf32> -> vector<64x8xf32>
    %c0_44 = arith.constant 0 : index
    %c0_45 = arith.constant 0 : index
    %c0_46 = arith.constant 0 : index
    %88 = vector.load %arg12[%c0_44, %c0_45, %c0_46] : memref<2x64x1xf32, #tpu.memory_space<vmem>>, vector<1x64x1xf32>
    %89 = vector.shape_cast %88 : vector<1x64x1xf32> to vector<64x1xf32>
    %90 = vector.broadcast %89 : vector<64x1xf32> to vector<64x8xf32>
    %91 = arith.addf %87, %90 : vector<64x8xf32>
    %cst_47 = arith.constant 0.000000e+00 : f32
    %92 = vector.broadcast %cst_47 : f32 to vector<64x8xf32>
    %93 = arith.maximumf %91, %92 : vector<64x8xf32>
    %c0_48 = arith.constant 0 : index
    %c0_49 = arith.constant 0 : index
    %c0_50 = arith.constant 0 : index
    %94 = vector.load %arg13[%c0_48, %c0_49, %c0_50] : memref<2x32x64xbf16, #tpu.memory_space<vmem>>, vector<1x32x64xbf16>
    %95 = vector.shape_cast %94 : vector<1x32x64xbf16> to vector<32x64xbf16>
    %96 = arith.truncf %93 : vector<64x8xf32> to vector<64x8xbf16>
    %cst_51 = arith.constant dense<0.000000e+00> : vector<32x8xf32>
    %97 = tpu.matmul %95, %96, %cst_51 {dimension_numbers = #tpu.dot_dimension_numbers<[1], [0], [0], [1], [0, 0, 1, 1], [], []>} : vector<32x64xbf16>, vector<64x8xbf16>, vector<32x8xf32> -> vector<32x8xf32>
    %c0_52 = arith.constant 0 : index
    %c0_53 = arith.constant 0 : index
    %c0_54 = arith.constant 0 : index
    %98 = vector.load %arg14[%c0_52, %c0_53, %c0_54] : memref<2x32x1xf32, #tpu.memory_space<vmem>>, vector<1x32x1xf32>
    %99 = vector.shape_cast %98 : vector<1x32x1xf32> to vector<32x1xf32>
    %100 = vector.broadcast %99 : vector<32x1xf32> to vector<32x8xf32>
    %101 = arith.addf %97, %100 : vector<32x8xf32>
    %102 = arith.addf %83, %101 : vector<32x8xf32>
    %c0_55 = arith.constant 0 : index
    %c0_56 = arith.constant 0 : index
    %c0_57 = arith.constant 0 : index
    %103 = vector.load %arg15[%c0_55, %c0_56, %c0_57] : memref<2x32x1xf32, #tpu.memory_space<vmem>>, vector<1x32x1xf32>
    %104 = vector.shape_cast %103 : vector<1x32x1xf32> to vector<32x1xf32>
    %c0_58 = arith.constant 0 : index
    %c0_59 = arith.constant 0 : index
    %c0_60 = arith.constant 0 : index
    %105 = vector.load %arg16[%c0_58, %c0_59, %c0_60] : memref<2x32x1xf32, #tpu.memory_space<vmem>>, vector<1x32x1xf32>
    %106 = vector.shape_cast %105 : vector<1x32x1xf32> to vector<32x1xf32>
    %cst_61 = arith.constant dense<0.000000e+00> : vector<8xf32>
    %107 = vector.multi_reduction <add>, %102, %cst_61 [0] : vector<32x8xf32> to vector<8xf32>
    %108 = vector.shape_cast %107 : vector<8xf32> to vector<1x8xf32>
    %cst_62 = arith.constant 3.200000e+01 : f32
    %109 = vector.broadcast %cst_62 : f32 to vector<1x8xf32>
    %110 = arith.divf %108, %109 : vector<1x8xf32>
    %111 = vector.broadcast %110 : vector<1x8xf32> to vector<32x8xf32>
    %112 = arith.subf %102, %111 : vector<32x8xf32>
    %113 = arith.mulf %112, %112 : vector<32x8xf32>
    %cst_63 = arith.constant dense<0.000000e+00> : vector<8xf32>
    %114 = vector.multi_reduction <add>, %113, %cst_63 [0] : vector<32x8xf32> to vector<8xf32>
    %115 = vector.shape_cast %114 : vector<8xf32> to vector<1x8xf32>
    %cst_64 = arith.constant 3.200000e+01 : f32
    %116 = vector.broadcast %cst_64 : f32 to vector<1x8xf32>
    %117 = arith.divf %115, %116 : vector<1x8xf32>
    %118 = vector.broadcast %110 : vector<1x8xf32> to vector<32x8xf32>
    %119 = arith.subf %102, %118 : vector<32x8xf32>
    %cst_65 = arith.constant 9.99999974E-6 : f32
    %120 = vector.broadcast %cst_65 : f32 to vector<1x8xf32>
    %121 = arith.addf %117, %120 : vector<1x8xf32>
    %122 = math.rsqrt %121 : vector<1x8xf32>
    %123 = vector.broadcast %122 : vector<1x8xf32> to vector<32x8xf32>
    %124 = arith.mulf %119, %123 : vector<32x8xf32>
    %125 = vector.broadcast %104 : vector<32x1xf32> to vector<32x8xf32>
    %126 = arith.mulf %124, %125 : vector<32x8xf32>
    %127 = vector.broadcast %106 : vector<32x1xf32> to vector<32x8xf32>
    %128 = arith.addf %126, %127 : vector<32x8xf32>
    %c1 = arith.constant 1 : index
    %c0_66 = arith.constant 0 : index
    %c0_67 = arith.constant 0 : index
    %129 = vector.load %arg8[%c1, %c0_66, %c0_67] : memref<2x32x32xbf16, #tpu.memory_space<vmem>>, vector<1x32x32xbf16>
    %130 = vector.shape_cast %129 : vector<1x32x32xbf16> to vector<32x32xbf16>
    %131 = arith.truncf %128 : vector<32x8xf32> to vector<32x8xbf16>
    %cst_68 = arith.constant dense<0.000000e+00> : vector<32x8xf32>
    %132 = tpu.matmul %130, %131, %cst_68 {dimension_numbers = #tpu.dot_dimension_numbers<[1], [0], [0], [1], [0, 0, 1, 1], [], []>} : vector<32x32xbf16>, vector<32x8xbf16>, vector<32x8xf32> -> vector<32x8xf32>
    %c1_69 = arith.constant 1 : index
    %c0_70 = arith.constant 0 : index
    %c0_71 = arith.constant 0 : index
    %133 = vector.load %arg9[%c1_69, %c0_70, %c0_71] : memref<2x32x1xf32, #tpu.memory_space<vmem>>, vector<1x32x1xf32>
    %134 = vector.shape_cast %133 : vector<1x32x1xf32> to vector<32x1xf32>
    %c1_72 = arith.constant 1 : index
    %c0_73 = arith.constant 0 : index
    %c0_74 = arith.constant 0 : index
    %135 = vector.load %arg10[%c1_72, %c0_73, %c0_74] : memref<2x32x1xf32, #tpu.memory_space<vmem>>, vector<1x32x1xf32>
    %136 = vector.shape_cast %135 : vector<1x32x1xf32> to vector<32x1xf32>
    %cst_75 = arith.constant dense<0.000000e+00> : vector<8xf32>
    %137 = vector.multi_reduction <add>, %132, %cst_75 [0] : vector<32x8xf32> to vector<8xf32>
    %138 = vector.shape_cast %137 : vector<8xf32> to vector<1x8xf32>
    %cst_76 = arith.constant 3.200000e+01 : f32
    %139 = vector.broadcast %cst_76 : f32 to vector<1x8xf32>
    %140 = arith.divf %138, %139 : vector<1x8xf32>
    %141 = vector.broadcast %140 : vector<1x8xf32> to vector<32x8xf32>
    %142 = arith.subf %132, %141 : vector<32x8xf32>
    %143 = arith.mulf %142, %142 : vector<32x8xf32>
    %cst_77 = arith.constant dense<0.000000e+00> : vector<8xf32>
    %144 = vector.multi_reduction <add>, %143, %cst_77 [0] : vector<32x8xf32> to vector<8xf32>
    %145 = vector.shape_cast %144 : vector<8xf32> to vector<1x8xf32>
    %cst_78 = arith.constant 3.200000e+01 : f32
    %146 = vector.broadcast %cst_78 : f32 to vector<1x8xf32>
    %147 = arith.divf %145, %146 : vector<1x8xf32>
    %148 = vector.broadcast %140 : vector<1x8xf32> to vector<32x8xf32>
    %149 = arith.subf %132, %148 : vector<32x8xf32>
    %cst_79 = arith.constant 9.99999974E-6 : f32
    %150 = vector.broadcast %cst_79 : f32 to vector<1x8xf32>
    %151 = arith.addf %147, %150 : vector<1x8xf32>
    %152 = math.rsqrt %151 : vector<1x8xf32>
    %153 = vector.broadcast %152 : vector<1x8xf32> to vector<32x8xf32>
    %154 = arith.mulf %149, %153 : vector<32x8xf32>
    %155 = vector.broadcast %134 : vector<32x1xf32> to vector<32x8xf32>
    %156 = arith.mulf %154, %155 : vector<32x8xf32>
    %157 = vector.broadcast %136 : vector<32x1xf32> to vector<32x8xf32>
    %158 = arith.addf %156, %157 : vector<32x8xf32>
    %c1_80 = arith.constant 1 : index
    %c0_81 = arith.constant 0 : index
    %c0_82 = arith.constant 0 : index
    %159 = vector.load %arg11[%c1_80, %c0_81, %c0_82] : memref<2x64x32xbf16, #tpu.memory_space<vmem>>, vector<1x64x32xbf16>
    %160 = vector.shape_cast %159 : vector<1x64x32xbf16> to vector<64x32xbf16>
    %161 = arith.truncf %158 : vector<32x8xf32> to vector<32x8xbf16>
    %cst_83 = arith.constant dense<0.000000e+00> : vector<64x8xf32>
    %162 = tpu.matmul %160, %161, %cst_83 {dimension_numbers = #tpu.dot_dimension_numbers<[1], [0], [0], [1], [0, 0, 1, 1], [], []>} : vector<64x32xbf16>, vector<32x8xbf16>, vector<64x8xf32> -> vector<64x8xf32>
    %c1_84 = arith.constant 1 : index
    %c0_85 = arith.constant 0 : index
    %c0_86 = arith.constant 0 : index
    %163 = vector.load %arg12[%c1_84, %c0_85, %c0_86] : memref<2x64x1xf32, #tpu.memory_space<vmem>>, vector<1x64x1xf32>
    %164 = vector.shape_cast %163 : vector<1x64x1xf32> to vector<64x1xf32>
    %165 = vector.broadcast %164 : vector<64x1xf32> to vector<64x8xf32>
    %166 = arith.addf %162, %165 : vector<64x8xf32>
    %cst_87 = arith.constant 0.000000e+00 : f32
    %167 = vector.broadcast %cst_87 : f32 to vector<64x8xf32>
    %168 = arith.maximumf %166, %167 : vector<64x8xf32>
    %c1_88 = arith.constant 1 : index
    %c0_89 = arith.constant 0 : index
    %c0_90 = arith.constant 0 : index
    %169 = vector.load %arg13[%c1_88, %c0_89, %c0_90] : memref<2x32x64xbf16, #tpu.memory_space<vmem>>, vector<1x32x64xbf16>
    %170 = vector.shape_cast %169 : vector<1x32x64xbf16> to vector<32x64xbf16>
    %171 = arith.truncf %168 : vector<64x8xf32> to vector<64x8xbf16>
    %cst_91 = arith.constant dense<0.000000e+00> : vector<32x8xf32>
    %172 = tpu.matmul %170, %171, %cst_91 {dimension_numbers = #tpu.dot_dimension_numbers<[1], [0], [0], [1], [0, 0, 1, 1], [], []>} : vector<32x64xbf16>, vector<64x8xbf16>, vector<32x8xf32> -> vector<32x8xf32>
    %c1_92 = arith.constant 1 : index
    %c0_93 = arith.constant 0 : index
    %c0_94 = arith.constant 0 : index
    %173 = vector.load %arg14[%c1_92, %c0_93, %c0_94] : memref<2x32x1xf32, #tpu.memory_space<vmem>>, vector<1x32x1xf32>
    %174 = vector.shape_cast %173 : vector<1x32x1xf32> to vector<32x1xf32>
    %175 = vector.broadcast %174 : vector<32x1xf32> to vector<32x8xf32>
    %176 = arith.addf %172, %175 : vector<32x8xf32>
    %177 = arith.addf %158, %176 : vector<32x8xf32>
    %c1_95 = arith.constant 1 : index
    %c0_96 = arith.constant 0 : index
    %c0_97 = arith.constant 0 : index
    %178 = vector.load %arg15[%c1_95, %c0_96, %c0_97] : memref<2x32x1xf32, #tpu.memory_space<vmem>>, vector<1x32x1xf32>
    %179 = vector.shape_cast %178 : vector<1x32x1xf32> to vector<32x1xf32>
    %c1_98 = arith.constant 1 : index
    %c0_99 = arith.constant 0 : index
    %c0_100 = arith.constant 0 : index
    %180 = vector.load %arg16[%c1_98, %c0_99, %c0_100] : memref<2x32x1xf32, #tpu.memory_space<vmem>>, vector<1x32x1xf32>
    %181 = vector.shape_cast %180 : vector<1x32x1xf32> to vector<32x1xf32>
    %cst_101 = arith.constant dense<0.000000e+00> : vector<8xf32>
    %182 = vector.multi_reduction <add>, %177, %cst_101 [0] : vector<32x8xf32> to vector<8xf32>
    %183 = vector.shape_cast %182 : vector<8xf32> to vector<1x8xf32>
    %cst_102 = arith.constant 3.200000e+01 : f32
    %184 = vector.broadcast %cst_102 : f32 to vector<1x8xf32>
    %185 = arith.divf %183, %184 : vector<1x8xf32>
    %186 = vector.broadcast %185 : vector<1x8xf32> to vector<32x8xf32>
    %187 = arith.subf %177, %186 : vector<32x8xf32>
    %188 = arith.mulf %187, %187 : vector<32x8xf32>
    %cst_103 = arith.constant dense<0.000000e+00> : vector<8xf32>
    %189 = vector.multi_reduction <add>, %188, %cst_103 [0] : vector<32x8xf32> to vector<8xf32>
    %190 = vector.shape_cast %189 : vector<8xf32> to vector<1x8xf32>
    %cst_104 = arith.constant 3.200000e+01 : f32
    %191 = vector.broadcast %cst_104 : f32 to vector<1x8xf32>
    %192 = arith.divf %190, %191 : vector<1x8xf32>
    %193 = vector.broadcast %185 : vector<1x8xf32> to vector<32x8xf32>
    %194 = arith.subf %177, %193 : vector<32x8xf32>
    %cst_105 = arith.constant 9.99999974E-6 : f32
    %195 = vector.broadcast %cst_105 : f32 to vector<1x8xf32>
    %196 = arith.addf %192, %195 : vector<1x8xf32>
    %197 = math.rsqrt %196 : vector<1x8xf32>
    %198 = vector.broadcast %197 : vector<1x8xf32> to vector<32x8xf32>
    %199 = arith.mulf %194, %198 : vector<32x8xf32>
    %200 = vector.broadcast %179 : vector<32x1xf32> to vector<32x8xf32>
    %201 = arith.mulf %199, %200 : vector<32x8xf32>
    %202 = vector.broadcast %181 : vector<32x1xf32> to vector<32x8xf32>
    %203 = arith.addf %201, %202 : vector<32x8xf32>
    %c0_106 = arith.constant 0 : index
    %c0_107 = arith.constant 0 : index
    %204 = vector.load %arg17[%c0_106, %c0_107] : memref<32x1xf32, #tpu.memory_space<vmem>>, vector<32x1xf32>
    %205 = vector.broadcast %204 : vector<32x1xf32> to vector<32x8xf32>
    %206 = arith.mulf %203, %205 : vector<32x8xf32>
    %cst_108 = arith.constant dense<0.000000e+00> : vector<8xf32>
    %207 = vector.multi_reduction <add>, %206, %cst_108 [0] : vector<32x8xf32> to vector<8xf32>
    %208 = vector.shape_cast %207 : vector<8xf32> to vector<1x8xf32>
    %c0_109 = arith.constant 0 : index
    %c0_110 = arith.constant 0 : index
    %209 = vector.load %arg18[%c0_109, %c0_110] : memref<1x1xf32, #tpu.memory_space<vmem>>, vector<1x1xf32>
    %210 = vector.broadcast %209 : vector<1x1xf32> to vector<1x8xf32>
    %211 = arith.addf %208, %210 : vector<1x8xf32>
    %c0_111 = arith.constant 0 : index
    %c0_112 = arith.constant 0 : index
    %212 = vector.load %arg19[%c0_111, %c0_112] : memref<32x1xf32, #tpu.memory_space<vmem>>, vector<32x1xf32>
    %213 = vector.broadcast %212 : vector<32x1xf32> to vector<32x8xf32>
    %214 = vector.broadcast %211 : vector<1x8xf32> to vector<32x8xf32>
    %215 = arith.mulf %213, %214 : vector<32x8xf32>
    %c0_113 = arith.constant 0 : index
    %c0_114 = arith.constant 0 : index
    %216 = vector.load %arg20[%c0_113, %c0_114] : memref<32x1xf32, #tpu.memory_space<vmem>>, vector<32x1xf32>
    %217 = vector.broadcast %216 : vector<32x1xf32> to vector<32x8xf32>
    %218 = arith.addf %215, %217 : vector<32x8xf32>
    %cst_115 = arith.constant 0.000000e+00 : f32
    %219 = vector.broadcast %cst_115 : f32 to vector<32x8xf32>
    %220 = arith.maximumf %218, %219 : vector<32x8xf32>
    %c0_116 = arith.constant 0 : index
    %c0_117 = arith.constant 0 : index
    %221 = vector.load %arg21[%c0_116, %c0_117] : memref<32x1xf32, #tpu.memory_space<vmem>>, vector<32x1xf32>
    %222 = vector.broadcast %221 : vector<32x1xf32> to vector<32x8xf32>
    %223 = arith.mulf %222, %220 : vector<32x8xf32>
    %cst_118 = arith.constant dense<0.000000e+00> : vector<8xf32>
    %224 = vector.multi_reduction <add>, %223, %cst_118 [0] : vector<32x8xf32> to vector<8xf32>
    %225 = vector.shape_cast %224 : vector<8xf32> to vector<1x8xf32>
    %c0_119 = arith.constant 0 : index
    %c0_120 = arith.constant 0 : index
    %226 = vector.load %arg22[%c0_119, %c0_120] : memref<1x1xf32, #tpu.memory_space<vmem>>, vector<1x1xf32>
    %227 = vector.broadcast %226 : vector<1x1xf32> to vector<1x8xf32>
    %228 = arith.addf %225, %227 : vector<1x8xf32>
    %c0_121 = arith.constant 0 : index
    %c0_122 = arith.constant 0 : index
    %229 = vector.load %arg28[%c0_121, %c0_122] : memref<1x8xf32, #tpu.memory_space<vmem>>, vector<1x8xf32>
    %230 = arith.addf %229, %228 : vector<1x8xf32>
    %c0_123 = arith.constant 0 : index
    %c0_124 = arith.constant 0 : index
    %231 = vector.load %arg28[%c0_123, %c0_124] : memref<1x8xf32, #tpu.memory_space<vmem>>, vector<1x8xf32>
    tpu.vector_store %arg28[%c0_123, %c0_124], %230 {strides = array<i32>} : memref<1x8xf32, #tpu.memory_space<vmem>>, vector<1x8xf32>,
    %c0_i32_125 = arith.constant 0 : i32
    %232 = arith.cmpi eq, %arg1, %c0_i32_125 : i32
    %233 = arith.extui %232 : i1 to i32
    %c0_i32_126 = arith.constant 0 : i32
    %234 = arith.cmpi ne, %233, %c0_i32_126 : i32
    scf.if %234 {
      %c0_127 = arith.constant 0 : index
      %c0_128 = arith.constant 0 : index
      %235 = vector.load %arg28[%c0_127, %c0_128] : memref<1x8xf32, #tpu.memory_space<vmem>>, vector<1x8xf32>
      %cst_129 = arith.constant 5.000000e-01 : f32
      %236 = vector.broadcast %cst_129 : f32 to vector<1x8xf32>
      %237 = arith.mulf %236, %235 : vector<1x8xf32>
      %c0_130 = arith.constant 0 : index
      %c0_131 = arith.constant 0 : index
      %238 = vector.load %arg23[%c0_130, %c0_131] : memref<32x1xf32, #tpu.memory_space<vmem>>, vector<32x1xf32>
      %239 = vector.broadcast %238 : vector<32x1xf32> to vector<32x8xf32>
      %240 = vector.broadcast %237 : vector<1x8xf32> to vector<32x8xf32>
      %241 = arith.mulf %239, %240 : vector<32x8xf32>
      %c0_132 = arith.constant 0 : index
      %c0_133 = arith.constant 0 : index
      %242 = vector.load %arg24[%c0_132, %c0_133] : memref<32x1xf32, #tpu.memory_space<vmem>>, vector<32x1xf32>
      %243 = vector.broadcast %242 : vector<32x1xf32> to vector<32x8xf32>
      %244 = arith.addf %241, %243 : vector<32x8xf32>
      %cst_134 = arith.constant 0.000000e+00 : f32
      %245 = vector.broadcast %cst_134 : f32 to vector<32x8xf32>
      %246 = arith.maximumf %244, %245 : vector<32x8xf32>
      %c0_135 = arith.constant 0 : index
      %c0_136 = arith.constant 0 : index
      %247 = vector.load %arg25[%c0_135, %c0_136] : memref<32x1xf32, #tpu.memory_space<vmem>>, vector<32x1xf32>
      %248 = vector.broadcast %247 : vector<32x1xf32> to vector<32x8xf32>
      %249 = arith.mulf %248, %246 : vector<32x8xf32>
      %cst_137 = arith.constant dense<0.000000e+00> : vector<8xf32>
      %250 = vector.multi_reduction <add>, %249, %cst_137 [0] : vector<32x8xf32> to vector<8xf32>
      %251 = vector.shape_cast %250 : vector<8xf32> to vector<1x8xf32>
      %c0_138 = arith.constant 0 : index
      %c0_139 = arith.constant 0 : index
      %252 = vector.load %arg26[%c0_138, %c0_139] : memref<1x1xf32, #tpu.memory_space<vmem>>, vector<1x1xf32>
      %253 = vector.broadcast %252 : vector<1x1xf32> to vector<1x8xf32>
      %254 = arith.addf %251, %253 : vector<1x8xf32>
      %c0_140 = arith.constant 0 : index
      %c0_141 = arith.constant 0 : index
      %255 = vector.load %arg27[%c0_140, %c0_141] : memref<1x8xf32, #tpu.memory_space<vmem>>, vector<1x8xf32>
      tpu.vector_store %arg27[%c0_140, %c0_141], %254 {strides = array<i32>} : memref<1x8xf32, #tpu.memory_space<vmem>>, vector<1x8xf32>,
    } else {
    }
    return
  }
  func.func @transform_0(%arg0: i32, %arg1: i32) -> (i32, i32) {
    %c0_i32 = arith.constant 0 : i32
    %c0_i32_0 = arith.constant 0 : i32
    return %c0_i32, %arg0 : i32, i32
  }
  func.func @transform_1(%arg0: i32, %arg1: i32) -> (i32, i32) {
    %c0_i32 = arith.constant 0 : i32
    %c0_i32_0 = arith.constant 0 : i32
    return %c0_i32, %arg0 : i32, i32
  }
  func.func @transform_2(%arg0: i32, %arg1: i32) -> (i32, i32, i32) {
    %c0_i32 = arith.constant 0 : i32
    %c0_i32_0 = arith.constant 0 : i32
    %c0_i32_1 = arith.constant 0 : i32
    return %arg1, %c0_i32, %c0_i32_0 : i32, i32, i32
  }
  func.func @transform_3(%arg0: i32, %arg1: i32) -> (i32, i32, i32) {
    %c0_i32 = arith.constant 0 : i32
    %c0_i32_0 = arith.constant 0 : i32
    %c0_i32_1 = arith.constant 0 : i32
    return %arg1, %c0_i32, %c0_i32_0 : i32, i32, i32
  }
  func.func @transform_4(%arg0: i32, %arg1: i32) -> (i32, i32) {
    %c0_i32 = arith.constant 0 : i32
    %c0_i32_0 = arith.constant 0 : i32
    %c0_i32_1 = arith.constant 0 : i32
    return %c0_i32, %c0_i32_0 : i32, i32
  }
  func.func @transform_5(%arg0: i32, %arg1: i32) -> (i32, i32) {
    %c0_i32 = arith.constant 0 : i32
    %c0_i32_0 = arith.constant 0 : i32
    %c0_i32_1 = arith.constant 0 : i32
    return %c0_i32, %c0_i32_0 : i32, i32
  }
  func.func @transform_6(%arg0: i32, %arg1: i32) -> (i32, i32, i32) {
    %c0_i32 = arith.constant 0 : i32
    %c0_i32_0 = arith.constant 0 : i32
    %c0_i32_1 = arith.constant 0 : i32
    %c0_i32_2 = arith.constant 0 : i32
    return %c0_i32, %c0_i32_0, %c0_i32_1 : i32, i32, i32
  }
  func.func @transform_7(%arg0: i32, %arg1: i32) -> (i32, i32, i32) {
    %c0_i32 = arith.constant 0 : i32
    %c0_i32_0 = arith.constant 0 : i32
    %c0_i32_1 = arith.constant 0 : i32
    %c0_i32_2 = arith.constant 0 : i32
    return %c0_i32, %c0_i32_0, %c0_i32_1 : i32, i32, i32
  }
  func.func @transform_8(%arg0: i32, %arg1: i32) -> (i32, i32, i32) {
    %c0_i32 = arith.constant 0 : i32
    %c0_i32_0 = arith.constant 0 : i32
    %c0_i32_1 = arith.constant 0 : i32
    %c0_i32_2 = arith.constant 0 : i32
    return %c0_i32, %c0_i32_0, %c0_i32_1 : i32, i32, i32
  }
  func.func @transform_9(%arg0: i32, %arg1: i32) -> (i32, i32, i32) {
    %c0_i32 = arith.constant 0 : i32
    %c0_i32_0 = arith.constant 0 : i32
    %c0_i32_1 = arith.constant 0 : i32
    %c0_i32_2 = arith.constant 0 : i32
    return %c0_i32, %c0_i32_0, %c0_i32_1 : i32, i32, i32
  }
  func.func @transform_10(%arg0: i32, %arg1: i32) -> (i32, i32, i32) {
    %c0_i32 = arith.constant 0 : i32
    %c0_i32_0 = arith.constant 0 : i32
    %c0_i32_1 = arith.constant 0 : i32
    %c0_i32_2 = arith.constant 0 : i32
    return %c0_i32, %c0_i32_0, %c0_i32_1 : i32, i32, i32
  }
  func.func @transform_11(%arg0: i32, %arg1: i32) -> (i32, i32, i32) {
    %c0_i32 = arith.constant 0 : i32
    %c0_i32_0 = arith.constant 0 : i32
    %c0_i32_1 = arith.constant 0 : i32
    %c0_i32_2 = arith.constant 0 : i32
    return %c0_i32, %c0_i32_0, %c0_i32_1 : i32, i32, i32
  }
  func.func @transform_12(%arg0: i32, %arg1: i32) -> (i32, i32, i32) {
    %c0_i32 = arith.constant 0 : i32
    %c0_i32_0 = arith.constant 0 : i32
    %c0_i32_1 = arith.constant 0 : i32
    %c0_i32_2 = arith.constant 0 : i32
    return %c0_i32, %c0_i32_0, %c0_i32_1 : i32, i32, i32
  }
  func.func @transform_13(%arg0: i32, %arg1: i32) -> (i32, i32, i32) {
    %c0_i32 = arith.constant 0 : i32
    %c0_i32_0 = arith.constant 0 : i32
    %c0_i32_1 = arith.constant 0 : i32
    %c0_i32_2 = arith.constant 0 : i32
    return %c0_i32, %c0_i32_0, %c0_i32_1 : i32, i32, i32
  }
  func.func @transform_14(%arg0: i32, %arg1: i32) -> (i32, i32, i32) {
    %c0_i32 = arith.constant 0 : i32
    %c0_i32_0 = arith.constant 0 : i32
    %c0_i32_1 = arith.constant 0 : i32
    %c0_i32_2 = arith.constant 0 : i32
    return %c0_i32, %c0_i32_0, %c0_i32_1 : i32, i32, i32
  }
  func.func @transform_15(%arg0: i32, %arg1: i32) -> (i32, i32) {
    %c0_i32 = arith.constant 0 : i32
    %c0_i32_0 = arith.constant 0 : i32
    %c0_i32_1 = arith.constant 0 : i32
    return %c0_i32, %c0_i32_0 : i32, i32
  }
  func.func @transform_16(%arg0: i32, %arg1: i32) -> (i32, i32) {
    %c0_i32 = arith.constant 0 : i32
    %c0_i32_0 = arith.constant 0 : i32
    %c0_i32_1 = arith.constant 0 : i32
    return %c0_i32, %c0_i32_0 : i32, i32
  }
  func.func @transform_17(%arg0: i32, %arg1: i32) -> (i32, i32) {
    %c0_i32 = arith.constant 0 : i32
    %c0_i32_0 = arith.constant 0 : i32
    %c0_i32_1 = arith.constant 0 : i32
    return %c0_i32, %c0_i32_0 : i32, i32
  }
  func.func @transform_18(%arg0: i32, %arg1: i32) -> (i32, i32) {
    %c0_i32 = arith.constant 0 : i32
    %c0_i32_0 = arith.constant 0 : i32
    %c0_i32_1 = arith.constant 0 : i32
    return %c0_i32, %c0_i32_0 : i32, i32
  }
  func.func @transform_19(%arg0: i32, %arg1: i32) -> (i32, i32) {
    %c0_i32 = arith.constant 0 : i32
    %c0_i32_0 = arith.constant 0 : i32
    %c0_i32_1 = arith.constant 0 : i32
    return %c0_i32, %c0_i32_0 : i32, i32
  }
  func.func @transform_20(%arg0: i32, %arg1: i32) -> (i32, i32) {
    %c0_i32 = arith.constant 0 : i32
    %c0_i32_0 = arith.constant 0 : i32
    %c0_i32_1 = arith.constant 0 : i32
    return %c0_i32, %c0_i32_0 : i32, i32
  }
  func.func @transform_21(%arg0: i32, %arg1: i32) -> (i32, i32) {
    %c0_i32 = arith.constant 0 : i32
    %c0_i32_0 = arith.constant 0 : i32
    %c0_i32_1 = arith.constant 0 : i32
    return %c0_i32, %c0_i32_0 : i32, i32
  }
  func.func @transform_22(%arg0: i32, %arg1: i32) -> (i32, i32) {
    %c0_i32 = arith.constant 0 : i32
    %c0_i32_0 = arith.constant 0 : i32
    %c0_i32_1 = arith.constant 0 : i32
    return %c0_i32, %c0_i32_0 : i32, i32
  }
  func.func @transform_23(%arg0: i32, %arg1: i32) -> (i32, i32) {
    %c0_i32 = arith.constant 0 : i32
    %c0_i32_0 = arith.constant 0 : i32
    %c0_i32_1 = arith.constant 0 : i32
    return %c0_i32, %c0_i32_0 : i32, i32
  }
  func.func @transform_24(%arg0: i32, %arg1: i32) -> (i32, i32) {
    %c0_i32 = arith.constant 0 : i32
    %c0_i32_0 = arith.constant 0 : i32
    %c0_i32_1 = arith.constant 0 : i32
    return %c0_i32, %c0_i32_0 : i32, i32
  }
  func.func @transform_25(%arg0: i32, %arg1: i32) -> (i32, i32) {
    %c0_i32 = arith.constant 0 : i32
    %c0_i32_0 = arith.constant 0 : i32
    return %c0_i32, %arg0 : i32, i32
  }
}

</mosaic_0001>

<llo_original>
// kernel: tpu_custom_call.1
$region0: #{tpu_custom_call.1}
  #allocation0 [shape = 'u32[]', space=smem, size = 0x4, offset = 0x4, fixed_abs, tag = 'smem constant byte address 0x4 - core index']
  #allocation1 [shape = 'u32[72,128]{1,0:T(1,128)}', space=vmem, size = 0x9000, scoped, tag = 'internal scratch']
  #allocation2 [shape = 'f32[1,8]{1,0:T(1,128)}', space=vmem, size = 0x200, scoped, tag = 'scratch operand']
  #allocation3 [shape = 'f32[1,1]{1,0:T(1,128)S(1)}', space=vmem, size = 0x200, scoped, tag = 'scoped memory for tpu_custom_call.1']
  #allocation4 [shape = 'f32[1,1]{1,0:T(1,128)S(1)}', space=vmem, size = 0x200, scoped, tag = 'scoped memory for tpu_custom_call.1']
  #allocation5 [shape = 'f32[1,1]{1,0:T(1,128)S(1)}', space=vmem, size = 0x200, scoped, tag = 'scoped memory for tpu_custom_call.1']
  %s0 = inlined_call_operand.vmem [shape: s32[1,8], index: 0, kind: input, shape index: {}]
  %s1 = inlined_call_operand.vmem [shape: s32[1,8], index: 1, kind: input, shape index: {}]
  %s2 = inlined_call_operand.vmem [shape: bf16[1,128,128], index: 2, kind: input, shape index: {}]
  %s3 = inlined_call_operand.vmem [shape: f32[1,128,1], index: 3, kind: input, shape index: {}]
  %s4 = inlined_call_operand.vmem [shape: f32[32,1], index: 4, kind: input, shape index: {}]
  %s5 = inlined_call_operand.vmem [shape: f32[32,1], index: 5, kind: input, shape index: {}]
  %s6 = inlined_call_operand.vmem [shape: bf16[2,32,32], index: 6, kind: input, shape index: {}]
  %s7 = inlined_call_operand.vmem [shape: f32[2,32,1], index: 7, kind: input, shape index: {}]
  %s8 = inlined_call_operand.vmem [shape: f32[2,32,1], index: 8, kind: input, shape index: {}]
  %s9 = inlined_call_operand.vmem [shape: bf16[2,64,32], index: 9, kind: input, shape index: {}]
  %s10 = inlined_call_operand.vmem [shape: f32[2,64,1], index: 10, kind: input, shape index: {}]
  %s11 = inlined_call_operand.vmem [shape: bf16[2,32,64], index: 11, kind: input, shape index: {}]
  %s12 = inlined_call_operand.vmem [shape: f32[2,32,1], index: 12, kind: input, shape index: {}]
  %s13 = inlined_call_operand.vmem [shape: f32[2,32,1], index: 13, kind: input, shape index: {}]
  %s14 = inlined_call_operand.vmem [shape: f32[2,32,1], index: 14, kind: input, shape index: {}]
  %s15 = inlined_call_operand.vmem [shape: f32[32,1], index: 15, kind: input, shape index: {}]
  %s16 = inlined_call_operand.<no memory space> [shape: f32[1,1], index: 16, kind: input, shape index: {}]
  %s17 = inlined_call_operand.vmem [shape: f32[32,1], index: 17, kind: input, shape index: {}]
  %s18 = inlined_call_operand.vmem [shape: f32[32,1], index: 18, kind: input, shape index: {}]
  %s19 = inlined_call_operand.vmem [shape: f32[32,1], index: 19, kind: input, shape index: {}]
  %s20 = inlined_call_operand.<no memory space> [shape: f32[1,1], index: 20, kind: input, shape index: {}]
  %s21 = inlined_call_operand.vmem [shape: f32[32,1], index: 21, kind: input, shape index: {}]
  %s22 = inlined_call_operand.vmem [shape: f32[32,1], index: 22, kind: input, shape index: {}]
  %s23 = inlined_call_operand.vmem [shape: f32[32,1], index: 23, kind: input, shape index: {}]
  %s24 = inlined_call_operand.<no memory space> [shape: f32[1,1], index: 24, kind: input, shape index: {}]
  %s25 = inlined_call_operand.hbm [shape: f32[1,8], index: 25, kind: output, shape index: {}]
  %s26 = sld [smem:[#allocation0]]
  $region118: #{tpu_custom_call.1} parent=0
    _
  %s28 = ssub.s32 1, %s26
  %s29 = scalar_select 0, %s28, %s26
  %v30 = vstv %s16
  %31 = vst [vmem:[#allocation3] sm:$0x1] %v30
  %v32 = vstv %s20
  %33 = vst [vmem:[#allocation4] sm:$0x1] %v32
  %v34 = vstv %s24
  %35 = vst [vmem:[#allocation5] sm:$0x1] %v34
  $region1: #{tpu_custom_call.1} parent=0
    #allocation6 [shape = 'u8[512]{0}', space=vmem, size = 0x400, scoped, tag = 'output window, operand 0, single buffered']
    #allocation7 [shape = 's32[1]{0}', space=sflag, size = 0x4, scoped, tag = 'scoped memory for tpu_custom_call.1']
    %36 = vsyncpa [#allocation7], 0
    // Predicated region
    $region2: #{tpu_custom_call.1} parent=1 // pred_check
      _
    $region3: #{tpu_custom_call.1} parent=1 // pred_check_branch
      %38 = sbr.rel (0) target = $region5
    $region4: #{tpu_custom_call.1} parent=1 // pred_region
      _
    $region5: #{tpu_custom_call.1} parent=1 // pred_fallthru
      _
    // Predicated region
    $region6: #{tpu_custom_call.1} parent=1 // pred_check
      _
    $region7: #{tpu_custom_call.1} parent=1 // pred_check_branch
      %40 = sbr.rel (0) target = $region9
    $region8: #{tpu_custom_call.1} parent=1 // pred_region
      _
    $region9: #{tpu_custom_call.1} parent=1 // pred_fallthru
      _
    // Predicated region
    $region10: #{tpu_custom_call.1} parent=1 // pred_check
      _
    $region11: #{tpu_custom_call.1} parent=1 // pred_check_branch
      %42 = sbr.rel (0) target = $region13
    $region12: #{tpu_custom_call.1} parent=1 // pred_region
      _
    $region13: #{tpu_custom_call.1} parent=1 // pred_fallthru
      _
    // Predicated region
    $region14: #{tpu_custom_call.1} parent=1 // pred_check
      _
    $region15: #{tpu_custom_call.1} parent=1 // pred_check_branch
      %44 = sbr.rel (0) target = $region17
    $region16: #{tpu_custom_call.1} parent=1 // pred_region
      _
    $region17: #{tpu_custom_call.1} parent=1 // pred_fallthru
      _
    // Predicated region
    $region18: #{tpu_custom_call.1} parent=1 // pred_check
      _
    $region19: #{tpu_custom_call.1} parent=1 // pred_check_branch
      %46 = sbr.rel (0) target = $region21
    $region20: #{tpu_custom_call.1} parent=1 // pred_region
      _
    $region21: #{tpu_custom_call.1} parent=1 // pred_fallthru
      _
    // Predicated region
    $region22: #{tpu_custom_call.1} parent=1 // pred_check
      _
    $region23: #{tpu_custom_call.1} parent=1 // pred_check_branch
      %48 = sbr.rel (0) target = $region25
    $region24: #{tpu_custom_call.1} parent=1 // pred_region
      _
    $region25: #{tpu_custom_call.1} parent=1 // pred_fallthru
      _
    // Predicated region
    $region26: #{tpu_custom_call.1} parent=1 // pred_check
      _
    $region27: #{tpu_custom_call.1} parent=1 // pred_check_branch
      %50 = sbr.rel (0) target = $region29
    $region28: #{tpu_custom_call.1} parent=1 // pred_region
      _
    $region29: #{tpu_custom_call.1} parent=1 // pred_fallthru
      _
    // Predicated region
    $region30: #{tpu_custom_call.1} parent=1 // pred_check
      _
    $region31: #{tpu_custom_call.1} parent=1 // pred_check_branch
      %52 = sbr.rel (0) target = $region33
    $region32: #{tpu_custom_call.1} parent=1 // pred_region
      _
    $region33: #{tpu_custom_call.1} parent=1 // pred_fallthru
      _
    // Predicated region
    $region34: #{tpu_custom_call.1} parent=1 // pred_check
      _
    $region35: #{tpu_custom_call.1} parent=1 // pred_check_branch
      %54 = sbr.rel (0) target = $region37
    $region36: #{tpu_custom_call.1} parent=1 // pred_region
      _
    $region37: #{tpu_custom_call.1} parent=1 // pred_fallthru
      _
    // Predicated region
    $region38: #{tpu_custom_call.1} parent=1 // pred_check
      _
    $region39: #{tpu_custom_call.1} parent=1 // pred_check_branch
      %56 = sbr.rel (0) target = $region41
    $region40: #{tpu_custom_call.1} parent=1 // pred_region
      _
    $region41: #{tpu_custom_call.1} parent=1 // pred_fallthru
      _
    // Predicated region
    $region42: #{tpu_custom_call.1} parent=1 // pred_check
      _
    $region43: #{tpu_custom_call.1} parent=1 // pred_check_branch
      %58 = sbr.rel (0) target = $region45
    $region44: #{tpu_custom_call.1} parent=1 // pred_region
      _
    $region45: #{tpu_custom_call.1} parent=1 // pred_fallthru
      _
    // Predicated region
    $region46: #{tpu_custom_call.1} parent=1 // pred_check
      _
    $region47: #{tpu_custom_call.1} parent=1 // pred_check_branch
      %60 = sbr.rel (0) target = $region49
    $region48: #{tpu_custom_call.1} parent=1 // pred_region
      _
    $region49: #{tpu_custom_call.1} parent=1 // pred_fallthru
      _
    // Predicated region
    $region50: #{tpu_custom_call.1} parent=1 // pred_check
      _
    $region51: #{tpu_custom_call.1} parent=1 // pred_check_branch
      %62 = sbr.rel (0) target = $region53
    $region52: #{tpu_custom_call.1} parent=1 // pred_region
      _
    $region53: #{tpu_custom_call.1} parent=1 // pred_fallthru
      _
    // Predicated region
    $region54: #{tpu_custom_call.1} parent=1 // pred_check
      _
    $region55: #{tpu_custom_call.1} parent=1 // pred_check_branch
      %64 = sbr.rel (0) target = $region57
    $region56: #{tpu_custom_call.1} parent=1 // pred_region
      _
    $region57: #{tpu_custom_call.1} parent=1 // pred_fallthru
      _
    // Predicated region
    $region58: #{tpu_custom_call.1} parent=1 // pred_check
      _
    $region59: #{tpu_custom_call.1} parent=1 // pred_check_branch
      %66 = sbr.rel (0) target = $region61
    $region60: #{tpu_custom_call.1} parent=1 // pred_region
      _
    $region61: #{tpu_custom_call.1} parent=1 // pred_fallthru
      _
    // Predicated region
    $region62: #{tpu_custom_call.1} parent=1 // pred_check
      _
    $region63: #{tpu_custom_call.1} parent=1 // pred_check_branch
      %68 = sbr.rel (0) target = $region65
    $region64: #{tpu_custom_call.1} parent=1 // pred_region
      _
    $region65: #{tpu_custom_call.1} parent=1 // pred_fallthru
      _
    // Predicated region
    $region66: #{tpu_custom_call.1} parent=1 // pred_check
      _
    $region67: #{tpu_custom_call.1} parent=1 // pred_check_branch
      %70 = sbr.rel (0) target = $region69
    $region68: #{tpu_custom_call.1} parent=1 // pred_region
      _
    $region69: #{tpu_custom_call.1} parent=1 // pred_fallthru
      _
    // Predicated region
    $region70: #{tpu_custom_call.1} parent=1 // pred_check
      _
    $region71: #{tpu_custom_call.1} parent=1 // pred_check_branch
      %72 = sbr.rel (0) target = $region73
    $region72: #{tpu_custom_call.1} parent=1 // pred_region
      _
    $region73: #{tpu_custom_call.1} parent=1 // pred_fallthru
      _
    // Predicated region
    $region74: #{tpu_custom_call.1} parent=1 // pred_check
      _
    $region75: #{tpu_custom_call.1} parent=1 // pred_check_branch
      %74 = sbr.rel (0) target = $region77
    $region76: #{tpu_custom_call.1} parent=1 // pred_region
      _
    $region77: #{tpu_custom_call.1} parent=1 // pred_fallthru
      _
    // Predicated region
    $region78: #{tpu_custom_call.1} parent=1 // pred_check
      _
    $region79: #{tpu_custom_call.1} parent=1 // pred_check_branch
      %76 = sbr.rel (0) target = $region81
    $region80: #{tpu_custom_call.1} parent=1 // pred_region
      _
    $region81: #{tpu_custom_call.1} parent=1 // pred_fallthru
      _
    // Predicated region
    $region82: #{tpu_custom_call.1} parent=1 // pred_check
      _
    $region83: #{tpu_custom_call.1} parent=1 // pred_check_branch
      %78 = sbr.rel (0) target = $region85
    $region84: #{tpu_custom_call.1} parent=1 // pred_region
      _
    $region85: #{tpu_custom_call.1} parent=1 // pred_fallthru
      _
    // Predicated region
    $region86: #{tpu_custom_call.1} parent=1 // pred_check
      _
    $region87: #{tpu_custom_call.1} parent=1 // pred_check_branch
      %80 = sbr.rel (0) target = $region89
    $region88: #{tpu_custom_call.1} parent=1 // pred_region
      _
    $region89: #{tpu_custom_call.1} parent=1 // pred_fallthru
      _
    // Predicated region
    $region90: #{tpu_custom_call.1} parent=1 // pred_check
      _
    $region91: #{tpu_custom_call.1} parent=1 // pred_check_branch
      %82 = sbr.rel (0) target = $region93
    $region92: #{tpu_custom_call.1} parent=1 // pred_region
      _
    $region93: #{tpu_custom_call.1} parent=1 // pred_fallthru
      _
    // Predicated region
    $region94: #{tpu_custom_call.1} parent=1 // pred_check
      _
    $region95: #{tpu_custom_call.1} parent=1 // pred_check_branch
      %84 = sbr.rel (0) target = $region97
    $region96: #{tpu_custom_call.1} parent=1 // pred_region
      _
    $region97: #{tpu_custom_call.1} parent=1 // pred_fallthru
      _
    // Predicated region
    $region98: #{tpu_custom_call.1} parent=1 // pred_check
      _
    $region99: #{tpu_custom_call.1} parent=1 // pred_check_branch
      %86 = sbr.rel (0) target = $region101
    $region100: #{tpu_custom_call.1} parent=1 // pred_region
      _
    $region101: #{tpu_custom_call.1} parent=1 // pred_fallthru
      _
    %p88 = scmp.eq.s32.totalorder 0, 0
    // Predicated region
    $region102: #{tpu_custom_call.1} parent=1 // pred_check
      %p89 = pneg %p88
    $region103: #{tpu_custom_call.1} parent=1 // pred_check_branch
      %91 = sbr.rel (%p89) target = $region105
    $region104: #{tpu_custom_call.1} parent=1 // pred_region
      %vm92 = vcmask 57344
      %93 = vst.msk [vmem:[#allocation2] sm:$0x1] %vm92, 0.0
    $region105: #{tpu_custom_call.1} parent=1 // pred_fallthru
      _
    %v94 = vlaneseq
    %v95 = vshrl.u32 %v94, 7
    %v96 = vadd.s32 %v95, 8
    %v97 = vadd.s32 %v95, 16
    %v98 = vadd.s32 %v95, 24
    %v99 = vadd.s32 %v95, 32
    %v100 = vadd.s32 %v95, 40
    %v101 = vadd.s32 %v95, 48
    %v102 = vadd.s32 %v95, 56
    %v103 = vadd.s32 %v95, 64
    %v104 = vadd.s32 %v95, 72
    %v105 = vadd.s32 %v95, 80
    %v106 = vadd.s32 %v95, 88
    %v107 = vadd.s32 %v95, 96
    %v108 = vadd.s32 %v95, 104
    %v109 = vadd.s32 %v95, 112
    %v110 = vadd.s32 %v95, 120
    %v111 = vld [vmem:[%s0] sm:$0x1]
    %v112 = vperm.slane %v111, 0
    %vm113 = vcmp.eq.s32.totalorder %v95, %v112
    %vm114 = vcmp.eq.s32.totalorder %v96, %v112
    %vm115 = vcmp.eq.s32.totalorder %v97, %v112
    %vm116 = vcmp.eq.s32.totalorder %v98, %v112
    %vm117 = vcmp.eq.s32.totalorder %v99, %v112
    %vm118 = vcmp.eq.s32.totalorder %v100, %v112
    %vm119 = vcmp.eq.s32.totalorder %v101, %v112
    %vm120 = vcmp.eq.s32.totalorder %v102, %v112
    %vm121 = vcmp.eq.s32.totalorder %v103, %v112
    %vm122 = vcmp.eq.s32.totalorder %v104, %v112
    %vm123 = vcmp.eq.s32.totalorder %v105, %v112
    %vm124 = vcmp.eq.s32.totalorder %v106, %v112
    %vm125 = vcmp.eq.s32.totalorder %v107, %v112
    %vm126 = vcmp.eq.s32.totalorder %v108, %v112
    %vm127 = vcmp.eq.s32.totalorder %v109, %v112
    %vm128 = vcmp.eq.s32.totalorder %v110, %v112
    %v129 = vsel %vm113, 1.0, 0.0
    %v130 = vsel %vm114, 1.0, 0.0
    %v131 = vsel %vm115, 1.0, 0.0
    %v132 = vsel %vm116, 1.0, 0.0
    %v133 = vsel %vm117, 1.0, 0.0
    %v134 = vsel %vm118, 1.0, 0.0
    %v135 = vsel %vm119, 1.0, 0.0
    %v136 = vsel %vm120, 1.0, 0.0
    %v137 = vsel %vm121, 1.0, 0.0
    %v138 = vsel %vm122, 1.0, 0.0
    %v139 = vsel %vm123, 1.0, 0.0
    %v140 = vsel %vm124, 1.0, 0.0
    %v141 = vsel %vm125, 1.0, 0.0
    %v142 = vsel %vm126, 1.0, 0.0
    %v143 = vsel %vm127, 1.0, 0.0
    %v144 = vsel %vm128, 1.0, 0.0
    %v145 = vpack.c.bf16 %v130, %v129
    %v146 = vpack.c.bf16 %v132, %v131
    %v147 = vpack.c.bf16 %v134, %v133
    %v148 = vpack.c.bf16 %v136, %v135
    %v149 = vpack.c.bf16 %v138, %v137
    %v150 = vpack.c.bf16 %v140, %v139
    %v151 = vpack.c.bf16 %v142, %v141
    %v152 = vpack.c.bf16 %v144, %v143
    %v153 = vld [vmem:[%s1] sm:$0x1]
    %v154 = vperm.slane %v153, 0
    %vm155 = vcmp.eq.s32.totalorder %v95, %v154
    %vm156 = vcmp.eq.s32.totalorder %v96, %v154
    %vm157 = vcmp.eq.s32.totalorder %v97, %v154
    %vm158 = vcmp.eq.s32.totalorder %v98, %v154
    %vm159 = vcmp.eq.s32.totalorder %v99, %v154
    %vm160 = vcmp.eq.s32.totalorder %v100, %v154
    %vm161 = vcmp.eq.s32.totalorder %v101, %v154
    %vm162 = vcmp.eq.s32.totalorder %v102, %v154
    %vm163 = vcmp.eq.s32.totalorder %v103, %v154
    %vm164 = vcmp.eq.s32.totalorder %v104, %v154
    %vm165 = vcmp.eq.s32.totalorder %v105, %v154
    %vm166 = vcmp.eq.s32.totalorder %v106, %v154
    %vm167 = vcmp.eq.s32.totalorder %v107, %v154
    %vm168 = vcmp.eq.s32.totalorder %v108, %v154
    %vm169 = vcmp.eq.s32.totalorder %v109, %v154
    %vm170 = vcmp.eq.s32.totalorder %v110, %v154
    %v171 = vsel %vm155, 1.0, 0.0
    %v172 = vsel %vm156, 1.0, 0.0
    %v173 = vsel %vm157, 1.0, 0.0
    %v174 = vsel %vm158, 1.0, 0.0
    %v175 = vsel %vm159, 1.0, 0.0
    %v176 = vsel %vm160, 1.0, 0.0
    %v177 = vsel %vm161, 1.0, 0.0
    %v178 = vsel %vm162, 1.0, 0.0
    %v179 = vsel %vm163, 1.0, 0.0
    %v180 = vsel %vm164, 1.0, 0.0
    %v181 = vsel %vm165, 1.0, 0.0
    %v182 = vsel %vm166, 1.0, 0.0
    %v183 = vsel %vm167, 1.0, 0.0
    %v184 = vsel %vm168, 1.0, 0.0
    %v185 = vsel %vm169, 1.0, 0.0
    %v186 = vsel %vm170, 1.0, 0.0
    %v187 = vpack.c.bf16 %v172, %v171
    %v188 = vpack.c.bf16 %v174, %v173
    %v189 = vpack.c.bf16 %v176, %v175
    %v190 = vpack.c.bf16 %v178, %v177
    %v191 = vpack.c.bf16 %v180, %v179
    %v192 = vpack.c.bf16 %v182, %v181
    %v193 = vpack.c.bf16 %v184, %v183
    %v194 = vpack.c.bf16 %v186, %v185
    %v195 = vld [vmem:[%s2] sm:$0xf]
    %v196 = vld [vmem:[%s2 + $0x4] sm:$0xf]
    %v197 = vld [vmem:[%s2 + $0x8] sm:$0xf]
    %v198 = vld [vmem:[%s2 + $0xc] sm:$0xf]
    %v199 = vld [vmem:[%s2 + $0x10] sm:$0xf]
    %v200 = vld [vmem:[%s2 + $0x14] sm:$0xf]
    %v201 = vld [vmem:[%s2 + $0x18] sm:$0xf]
    %v202 = vld [vmem:[%s2 + $0x1c] sm:$0xf]
    %v203 = vld [vmem:[%s2 + $0x20] sm:$0xf]
    %v204 = vld [vmem:[%s2 + $0x24] sm:$0xf]
    %v205 = vld [vmem:[%s2 + $0x28] sm:$0xf]
    %v206 = vld [vmem:[%s2 + $0x2c] sm:$0xf]
    %v207 = vld [vmem:[%s2 + $0x30] sm:$0xf]
    %v208 = vld [vmem:[%s2 + $0x34] sm:$0xf]
    %v209 = vld [vmem:[%s2 + $0x38] sm:$0xf]
    %v210 = vld [vmem:[%s2 + $0x3c] sm:$0xf]
    %v211 = vld [vmem:[%s3] sm:$0xff]
    %v212 = vld [vmem:[%s3 + $0x8] sm:$0xff]
    %v213 = vld [vmem:[%s3 + $0x10] sm:$0xff]
    %v214 = vld [vmem:[%s3 + $0x18] sm:$0xff]
    %v215 = vld [vmem:[%s3 + $0x20] sm:$0xff]
    %v216 = vld [vmem:[%s3 + $0x28] sm:$0xff]
    %v217 = vld [vmem:[%s3 + $0x30] sm:$0xff]
    %v218 = vld [vmem:[%s3 + $0x38] sm:$0xff]
    %v219 = vld [vmem:[%s3 + $0x40] sm:$0xff]
    %v220 = vld [vmem:[%s3 + $0x48] sm:$0xff]
    %v221 = vld [vmem:[%s3 + $0x50] sm:$0xff]
    %v222 = vld [vmem:[%s3 + $0x58] sm:$0xff]
    %v223 = vld [vmem:[%s3 + $0x60] sm:$0xff]
    %v224 = vld [vmem:[%s3 + $0x68] sm:$0xff]
    %v225 = vld [vmem:[%s3 + $0x70] sm:$0xff]
    %v226 = vld [vmem:[%s3 + $0x78] sm:$0xff]
    %v243 = vunpack.c.l.b16 %v195
    %v244 = vunpack.c.l.b16 %v196
    %v245 = vunpack.c.l.b16 %v197
    %v246 = vunpack.c.l.b16 %v198
    %v247 = vunpack.c.l.b16 %v199
    %v248 = vunpack.c.l.b16 %v200
    %v249 = vunpack.c.l.b16 %v201
    %v250 = vunpack.c.l.b16 %v202
    %v251 = vunpack.c.l.b16 %v203
    %v252 = vunpack.c.l.b16 %v204
    %v253 = vunpack.c.l.b16 %v205
    %v254 = vunpack.c.l.b16 %v206
    %v255 = vunpack.c.l.b16 %v207
    %v256 = vunpack.c.l.b16 %v208
    %v257 = vunpack.c.l.b16 %v209
    %v258 = vunpack.c.l.b16 %v210
    %v259 = vpack.c.b16 %v244, %v243
    %v260 = vpack.c.b16 %v246, %v245
    %v261 = vpack.c.b16 %v248, %v247
    %v262 = vpack.c.b16 %v250, %v249
    %v263 = vpack.c.b16 %v252, %v251
    %v264 = vpack.c.b16 %v254, %v253
    %v265 = vpack.c.b16 %v256, %v255
    %v266 = vpack.c.b16 %v258, %v257
    %275 = vmatpush.bf16.msra.mxu0 %v152
    %276 = vmatpush.bf16.msra.mxu0 %v151
    %277 = vmatpush.bf16.msra.mxu0 %v150
    %278 = vmatpush.bf16.msra.mxu0 %v149
    %279 = vmatpush.bf16.msra.mxu0 %v148
    %280 = vmatpush.bf16.msra.mxu0 %v147
    %281 = vmatpush.bf16.msra.mxu0 %v146
    %282 = vmatpush.bf16.msra.mxu0 %v145
    %283 = vmatmul.bf16.gmra.mxu0 %v259
    %v284 = vpop.f32.mrf.mxu0
    %v285 = vadd.f32 0.0, %v284
    %v286 = vpop.f32.mrf.mxu0
    %v287 = vadd.f32 0.0, %v286
    %288 = vmatmul.bf16.gmra.mxu0 %v260
    %v289 = vpop.f32.mrf.mxu0
    %v290 = vadd.f32 0.0, %v289
    %v291 = vpop.f32.mrf.mxu0
    %v292 = vadd.f32 0.0, %v291
    %293 = vmatmul.bf16.gmra.mxu0 %v261
    %v294 = vpop.f32.mrf.mxu0
    %v295 = vadd.f32 0.0, %v294
    %v296 = vpop.f32.mrf.mxu0
    %v297 = vadd.f32 0.0, %v296
    %298 = vmatmul.bf16.gmra.mxu0 %v262
    %v299 = vpop.f32.mrf.mxu0
    %v300 = vadd.f32 0.0, %v299
    %v301 = vpop.f32.mrf.mxu0
    %v302 = vadd.f32 0.0, %v301
    %303 = vmatmul.bf16.gmra.mxu0 %v263
    %v304 = vpop.f32.mrf.mxu0
    %v305 = vadd.f32 0.0, %v304
    %v306 = vpop.f32.mrf.mxu0
    %v307 = vadd.f32 0.0, %v306
    %308 = vmatmul.bf16.gmra.mxu0 %v264
    %v309 = vpop.f32.mrf.mxu0
    %v310 = vadd.f32 0.0, %v309
    %v311 = vpop.f32.mrf.mxu0
    %v312 = vadd.f32 0.0, %v311
    %313 = vmatmul.bf16.gmra.mxu0 %v265
    %v314 = vpop.f32.mrf.mxu0
    %v315 = vadd.f32 0.0, %v314
    %v316 = vpop.f32.mrf.mxu0
    %v317 = vadd.f32 0.0, %v316
    %318 = vmatmul.bf16.gmra.mxu0 %v266
    %v319 = vpop.f32.mrf.mxu0
    %v320 = vadd.f32 0.0, %v319
    %v321 = vpop.f32.mrf.mxu0
    %v322 = vadd.f32 0.0, %v321
    %323 = vdwg.mxu0
    %325 = vset.pattern.permute.xlu0 0
    %326 = vperm.xlu0 %325, %v211
    %v327 = vpop.permute.xlu0 %326
    %330 = vset.pattern.permute.xlu0 0
    %331 = vperm.xlu0 %330, %v212
    %v332 = vpop.permute.xlu0 %331
    %335 = vset.pattern.permute.xlu0 0
    %336 = vperm.xlu0 %335, %v213
    %v337 = vpop.permute.xlu0 %336
    %340 = vset.pattern.permute.xlu0 0
    %341 = vperm.xlu0 %340, %v214
    %v342 = vpop.permute.xlu0 %341
    %345 = vset.pattern.permute.xlu0 0
    %346 = vperm.xlu0 %345, %v215
    %v347 = vpop.permute.xlu0 %346
    %350 = vset.pattern.permute.xlu0 0
    %351 = vperm.xlu0 %350, %v216
    %v352 = vpop.permute.xlu0 %351
    %355 = vset.pattern.permute.xlu0 0
    %356 = vperm.xlu0 %355, %v217
    %v357 = vpop.permute.xlu0 %356
    %360 = vset.pattern.permute.xlu0 0
    %361 = vperm.xlu0 %360, %v218
    %v362 = vpop.permute.xlu0 %361
    %365 = vset.pattern.permute.xlu0 0
    %366 = vperm.xlu0 %365, %v219
    %v367 = vpop.permute.xlu0 %366
    %370 = vset.pattern.permute.xlu0 0
    %371 = vperm.xlu0 %370, %v220
    %v372 = vpop.permute.xlu0 %371
    %375 = vset.pattern.permute.xlu0 0
    %376 = vperm.xlu0 %375, %v221
    %v377 = vpop.permute.xlu0 %376
    %380 = vset.pattern.permute.xlu0 0
    %381 = vperm.xlu0 %380, %v222
    %v382 = vpop.permute.xlu0 %381
    %385 = vset.pattern.permute.xlu0 0
    %386 = vperm.xlu0 %385, %v223
    %v387 = vpop.permute.xlu0 %386
    %390 = vset.pattern.permute.xlu0 0
    %391 = vperm.xlu0 %390, %v224
    %v392 = vpop.permute.xlu0 %391
    %395 = vset.pattern.permute.xlu0 0
    %396 = vperm.xlu0 %395, %v225
    %v397 = vpop.permute.xlu0 %396
    %400 = vset.pattern.permute.xlu0 0
    %401 = vperm.xlu0 %400, %v226
    %v402 = vpop.permute.xlu0 %401
    %v404 = vmul.f32 %v285, %v327
    %v405 = vmul.f32 %v287, %v332
    %v406 = vmul.f32 %v290, %v337
    %v407 = vmul.f32 %v292, %v342
    %v408 = vmul.f32 %v295, %v347
    %v409 = vmul.f32 %v297, %v352
    %v410 = vmul.f32 %v300, %v357
    %v411 = vmul.f32 %v302, %v362
    %v412 = vmul.f32 %v305, %v367
    %v413 = vmul.f32 %v307, %v372
    %v414 = vmul.f32 %v310, %v377
    %v415 = vmul.f32 %v312, %v382
    %v416 = vmul.f32 %v315, %v387
    %v417 = vmul.f32 %v317, %v392
    %v418 = vmul.f32 %v320, %v397
    %v419 = vmul.f32 %v322, %v402
    %420 = vmatpush.bf16.msra.mxu0 %v194
    %421 = vmatpush.bf16.msra.mxu0 %v193
    %422 = vmatpush.bf16.msra.mxu0 %v192
    %423 = vmatpush.bf16.msra.mxu0 %v191
    %424 = vmatpush.bf16.msra.mxu0 %v190
    %425 = vmatpush.bf16.msra.mxu0 %v189
    %426 = vmatpush.bf16.msra.mxu0 %v188
    %427 = vmatpush.bf16.msra.mxu0 %v187
    %428 = vmatmul.bf16.gmra.mxu0 %v259
    %v429 = vpop.f32.mrf.mxu0
    %v430 = vadd.f32 0.0, %v429
    %v431 = vpop.f32.mrf.mxu0
    %v432 = vadd.f32 0.0, %v431
    %433 = vmatmul.bf16.gmra.mxu0 %v260
    %v434 = vpop.f32.mrf.mxu0
    %v435 = vadd.f32 0.0, %v434
    %v436 = vpop.f32.mrf.mxu0
    %v437 = vadd.f32 0.0, %v436
    %438 = vmatmul.bf16.gmra.mxu0 %v261
    %v439 = vpop.f32.mrf.mxu0
    %v440 = vadd.f32 0.0, %v439
    %v441 = vpop.f32.mrf.mxu0
    %v442 = vadd.f32 0.0, %v441
    %443 = vmatmul.bf16.gmra.mxu0 %v262
    %v444 = vpop.f32.mrf.mxu0
    %v445 = vadd.f32 0.0, %v444
    %v446 = vpop.f32.mrf.mxu0
    %v447 = vadd.f32 0.0, %v446
    %448 = vmatmul.bf16.gmra.mxu0 %v263
    %v449 = vpop.f32.mrf.mxu0
    %v450 = vadd.f32 0.0, %v449
    %v451 = vpop.f32.mrf.mxu0
    %v452 = vadd.f32 0.0, %v451
    %453 = vmatmul.bf16.gmra.mxu0 %v264
    %v454 = vpop.f32.mrf.mxu0
    %v455 = vadd.f32 0.0, %v454
    %v456 = vpop.f32.mrf.mxu0
    %v457 = vadd.f32 0.0, %v456
    %458 = vmatmul.bf16.gmra.mxu0 %v265
    %v459 = vpop.f32.mrf.mxu0
    %v460 = vadd.f32 0.0, %v459
    %v461 = vpop.f32.mrf.mxu0
    %v462 = vadd.f32 0.0, %v461
    %463 = vmatmul.bf16.gmra.mxu0 %v266
    %v464 = vpop.f32.mrf.mxu0
    %v465 = vadd.f32 0.0, %v464
    %v466 = vpop.f32.mrf.mxu0
    %v467 = vadd.f32 0.0, %v466
    %468 = vdwg.mxu0
    %v469 = vmul.f32 %v430, %v327
    %v470 = vmul.f32 %v432, %v332
    %v471 = vmul.f32 %v435, %v337
    %v472 = vmul.f32 %v437, %v342
    %v473 = vmul.f32 %v440, %v347
    %v474 = vmul.f32 %v442, %v352
    %v475 = vmul.f32 %v445, %v357
    %v476 = vmul.f32 %v447, %v362
    %v477 = vmul.f32 %v450, %v367
    %v478 = vmul.f32 %v452, %v372
    %v479 = vmul.f32 %v455, %v377
    %v480 = vmul.f32 %v457, %v382
    %v481 = vmul.f32 %v460, %v387
    %v482 = vmul.f32 %v462, %v392
    %v483 = vmul.f32 %v465, %v397
    %v484 = vmul.f32 %v467, %v402
    %v485 = vmul.f32 %v404, %v469
    %v486 = vmul.f32 %v405, %v470
    %v487 = vmul.f32 %v406, %v471
    %v488 = vmul.f32 %v407, %v472
    %v489 = vmul.f32 %v408, %v473
    %v490 = vmul.f32 %v409, %v474
    %v491 = vmul.f32 %v410, %v475
    %v492 = vmul.f32 %v411, %v476
    %v493 = vmul.f32 %v412, %v477
    %v494 = vmul.f32 %v413, %v478
    %v495 = vmul.f32 %v414, %v479
    %v496 = vmul.f32 %v415, %v480
    %v497 = vmul.f32 %v416, %v481
    %v498 = vmul.f32 %v417, %v482
    %v499 = vmul.f32 %v418, %v483
    %v500 = vmul.f32 %v419, %v484
    %vm501 = vcmask 64512
    %v502 = vsel %vm501, %v485, 0.0
    %v503 = vsel %vm501, %v486, 0.0
    %v504 = vadd.f32 %v502, %v503
    %v505 = vsel %vm501, %v487, 0.0
    %v506 = vadd.f32 %v504, %v505
    %v507 = vsel %vm501, %v488, 0.0
    %v508 = vadd.f32 %v506, %v507
    %v509 = vsel %vm501, %v489, 0.0
    %v510 = vadd.f32 %v508, %v509
    %v511 = vsel %vm501, %v490, 0.0
    %v512 = vadd.f32 %v510, %v511
    %v513 = vsel %vm501, %v491, 0.0
    %v514 = vadd.f32 %v512, %v513
    %v515 = vsel %vm501, %v492, 0.0
    %v516 = vadd.f32 %v514, %v515
    %v517 = vsel %vm501, %v493, 0.0
    %v518 = vadd.f32 %v516, %v517
    %v519 = vsel %vm501, %v494, 0.0
    %v520 = vadd.f32 %v518, %v519
    %v521 = vsel %vm501, %v495, 0.0
    %v522 = vadd.f32 %v520, %v521
    %v523 = vsel %vm501, %v496, 0.0
    %v524 = vadd.f32 %v522, %v523
    %v525 = vsel %vm501, %v497, 0.0
    %v526 = vadd.f32 %v524, %v525
    %v527 = vsel %vm501, %v498, 0.0
    %v528 = vadd.f32 %v526, %v527
    %v529 = vsel %vm501, %v499, 0.0
    %v530 = vadd.f32 %v528, %v529
    %v531 = vsel %vm501, %v500, 0.0
    %v532 = vadd.f32 %v530, %v531
    %v533 = vrot.slane %v532, 4
    %v534 = vadd.f32 %v532, %v533
    %v535 = vrot.slane %v534, 2
    %v536 = vadd.f32 %v534, %v535
    %v537 = vrot.slane %v536, 1
    %v538 = vadd.f32 %v536, %v537
    %v539 = vadd.f32 %v404, 1e-08
    %v540 = vadd.f32 %v405, 1e-08
    %v541 = vadd.f32 %v406, 1e-08
    %v542 = vadd.f32 %v407, 1e-08
    %v543 = vadd.f32 %v408, 1e-08
    %v544 = vadd.f32 %v409, 1e-08
    %v545 = vadd.f32 %v410, 1e-08
    %v546 = vadd.f32 %v411, 1e-08
    %v547 = vadd.f32 %v412, 1e-08
    %v548 = vadd.f32 %v413, 1e-08
    %v549 = vadd.f32 %v414, 1e-08
    %v550 = vadd.f32 %v415, 1e-08
    %v551 = vadd.f32 %v416, 1e-08
    %v552 = vadd.f32 %v417, 1e-08
    %v553 = vadd.f32 %v418, 1e-08
    %v554 = vadd.f32 %v419, 1e-08
    %v555 = vadd.f32 %v469, 1e-08
    %v556 = vadd.f32 %v470, 1e-08
    %v557 = vadd.f32 %v471, 1e-08
    %v558 = vadd.f32 %v472, 1e-08
    %v559 = vadd.f32 %v473, 1e-08
    %v560 = vadd.f32 %v474, 1e-08
    %v561 = vadd.f32 %v475, 1e-08
    %v562 = vadd.f32 %v476, 1e-08
    %v563 = vadd.f32 %v477, 1e-08
    %v564 = vadd.f32 %v478, 1e-08
    %v565 = vadd.f32 %v479, 1e-08
    %v566 = vadd.f32 %v480, 1e-08
    %v567 = vadd.f32 %v481, 1e-08
    %v568 = vadd.f32 %v482, 1e-08
    %v569 = vadd.f32 %v483, 1e-08
    %v570 = vadd.f32 %v484, 1e-08
    %v571 = vmul.f32 %v539, %v539
    %v572 = vmul.f32 %v540, %v540
    %v573 = vmul.f32 %v541, %v541
    %v574 = vmul.f32 %v542, %v542
    %v575 = vmul.f32 %v543, %v543
    %v576 = vmul.f32 %v544, %v544
    %v577 = vmul.f32 %v545, %v545
    %v578 = vmul.f32 %v546, %v546
    %v579 = vmul.f32 %v547, %v547
    %v580 = vmul.f32 %v548, %v548
    %v581 = vmul.f32 %v549, %v549
    %v582 = vmul.f32 %v550, %v550
    %v583 = vmul.f32 %v551, %v551
    %v584 = vmul.f32 %v552, %v552
    %v585 = vmul.f32 %v553, %v553
    %v586 = vmul.f32 %v554, %v554
    %v587 = vsel %vm501, %v571, 0.0
    %v588 = vsel %vm501, %v572, 0.0
    %v589 = vadd.f32 %v587, %v588
    %v590 = vsel %vm501, %v573, 0.0
    %v591 = vadd.f32 %v589, %v590
    %v592 = vsel %vm501, %v574, 0.0
    %v593 = vadd.f32 %v591, %v592
    %v594 = vsel %vm501, %v575, 0.0
    %v595 = vadd.f32 %v593, %v594
    %v596 = vsel %vm501, %v576, 0.0
    %v597 = vadd.f32 %v595, %v596
    %v598 = vsel %vm501, %v577, 0.0
    %v599 = vadd.f32 %v597, %v598
    %v600 = vsel %vm501, %v578, 0.0
    %v601 = vadd.f32 %v599, %v600
    %v602 = vsel %vm501, %v579, 0.0
    %v603 = vadd.f32 %v601, %v602
    %v604 = vsel %vm501, %v580, 0.0
    %v605 = vadd.f32 %v603, %v604
    %v606 = vsel %vm501, %v581, 0.0
    %v607 = vadd.f32 %v605, %v606
    %v608 = vsel %vm501, %v582, 0.0
    %v609 = vadd.f32 %v607, %v608
    %v610 = vsel %vm501, %v583, 0.0
    %v611 = vadd.f32 %v609, %v610
    %v612 = vsel %vm501, %v584, 0.0
    %v613 = vadd.f32 %v611, %v612
    %v614 = vsel %vm501, %v585, 0.0
    %v615 = vadd.f32 %v613, %v614
    %v616 = vsel %vm501, %v586, 0.0
    %v617 = vadd.f32 %v615, %v616
    %v618 = vrot.slane %v617, 4
    %v619 = vadd.f32 %v617, %v618
    %v620 = vrot.slane %v619, 2
    %v621 = vadd.f32 %v619, %v620
    %v622 = vrot.slane %v621, 1
    %v623 = vadd.f32 %v621, %v622
    %v624 = vrsqrt.pop %v623
    %v625 = vmul.f32 %v624, %v623
    %v626 = vmul.f32 %v625, %v624
    %v627 = vmul.f32 0.5, %v626
    %v628 = vsub.f32 1.5, %v627
    %v629 = vmul.f32 %v624, %v628
    %v630 = vmul.f32 %v623, %v629
    %vm631 = vcmp.eq.f32.partialorder %v623, inf
    %v632 = vsel %vm631, %v623, %v630
    %vm633 = vcmp.eq.f32.partialorder %v623, 0.0
    %v634 = vand.u32 %v623, 2147483648
    %v635 = vsel %vm633, %v634, %v632
    %v636 = vmul.f32 %v555, %v555
    %v637 = vmul.f32 %v556, %v556
    %v638 = vmul.f32 %v557, %v557
    %v639 = vmul.f32 %v558, %v558
    %v640 = vmul.f32 %v559, %v559
    %v641 = vmul.f32 %v560, %v560
    %v642 = vmul.f32 %v561, %v561
    %v643 = vmul.f32 %v562, %v562
    %v644 = vmul.f32 %v563, %v563
    %v645 = vmul.f32 %v564, %v564
    %v646 = vmul.f32 %v565, %v565
    %v647 = vmul.f32 %v566, %v566
    %v648 = vmul.f32 %v567, %v567
    %v649 = vmul.f32 %v568, %v568
    %v650 = vmul.f32 %v569, %v569
    %v651 = vmul.f32 %v570, %v570
    %v652 = vsel %vm501, %v636, 0.0
    %v653 = vsel %vm501, %v637, 0.0
    %v654 = vadd.f32 %v652, %v653
    %v655 = vsel %vm501, %v638, 0.0
    %v656 = vadd.f32 %v654, %v655
    %v657 = vsel %vm501, %v639, 0.0
    %v658 = vadd.f32 %v656, %v657
    %v659 = vsel %vm501, %v640, 0.0
    %v660 = vadd.f32 %v658, %v659
    %v661 = vsel %vm501, %v641, 0.0
    %v662 = vadd.f32 %v660, %v661
    %v663 = vsel %vm501, %v642, 0.0
    %v664 = vadd.f32 %v662, %v663
    %v665 = vsel %vm501, %v643, 0.0
    %v666 = vadd.f32 %v664, %v665
    %v667 = vsel %vm501, %v644, 0.0
    %v668 = vadd.f32 %v666, %v667
    %v669 = vsel %vm501, %v645, 0.0
    %v670 = vadd.f32 %v668, %v669
    %v671 = vsel %vm501, %v646, 0.0
    %v672 = vadd.f32 %v670, %v671
    %v673 = vsel %vm501, %v647, 0.0
    %v674 = vadd.f32 %v672, %v673
    %v675 = vsel %vm501, %v648, 0.0
    %v676 = vadd.f32 %v674, %v675
    %v677 = vsel %vm501, %v649, 0.0
    %v678 = vadd.f32 %v676, %v677
    %v679 = vsel %vm501, %v650, 0.0
    %v680 = vadd.f32 %v678, %v679
    %v681 = vsel %vm501, %v651, 0.0
    %v682 = vadd.f32 %v680, %v681
    %v683 = vrot.slane %v682, 4
    %v684 = vadd.f32 %v682, %v683
    %v685 = vrot.slane %v684, 2
    %v686 = vadd.f32 %v684, %v685
    %v687 = vrot.slane %v686, 1
    %v688 = vadd.f32 %v686, %v687
    %v689 = vrsqrt.pop %v688
    %v690 = vmul.f32 %v689, %v688
    %v691 = vmul.f32 %v690, %v689
    %v692 = vmul.f32 0.5, %v691
    %v693 = vsub.f32 1.5, %v692
    %v694 = vmul.f32 %v689, %v693
    %v695 = vmul.f32 %v688, %v694
    %vm696 = vcmp.eq.f32.partialorder %v688, inf
    %v697 = vsel %vm696, %v688, %v695
    %vm698 = vcmp.eq.f32.partialorder %v688, 0.0
    %v699 = vand.u32 %v688, 2147483648
    %v700 = vsel %vm698, %v699, %v697
    %v701 = vmul.f32 %v635, %v700
    %v702 = vmax.f32 %v701, 1e-30
    %v703 = vrcp.pop %v702
    %v704 = vmul.f32 %v702, %v703
    %v705 = vsub.f32 1.0, %v704
    %v706 = vmul.f32 %v703, %v705
    %v707 = vadd.f32 %v703, %v706
    %vm708 = vweird.f32 %v702
    %vm709 = vweird.f32 %v703
    %vm710 = vmor %vm708, %vm709
    %v711 = vsel %vm710, %v703, %v707
    %v712 = vand.u32 2147483647, %v702
    %vm713 = vcmp.eq.f32.partialorder %v712, 8.507059e+37
    %v714 = vand.u32 %v702, 2147483648
    %v715 = vor.u32 1.1754944e-38, %v714
    %v716 = vsel %vm713, %v715, %v711
    %v717 = vmul.f32 %v538, %v716
    %v718 = vld [vmem:[%s4] sm:$0xff]
    %v719 = vld [vmem:[%s4 + $0x8] sm:$0xff]
    %v720 = vld [vmem:[%s4 + $0x10] sm:$0xff]
    %v721 = vld [vmem:[%s4 + $0x18] sm:$0xff]
    %723 = vset.pattern.permute.xlu0 0
    %724 = vperm.xlu0 %723, %v718
    %v725 = vpop.permute.xlu0 %724
    %728 = vset.pattern.permute.xlu0 0
    %729 = vperm.xlu0 %728, %v719
    %v730 = vpop.permute.xlu0 %729
    %733 = vset.pattern.permute.xlu0 0
    %734 = vperm.xlu0 %733, %v720
    %v735 = vpop.permute.xlu0 %734
    %738 = vset.pattern.permute.xlu0 0
    %739 = vperm.xlu0 %738, %v721
    %v740 = vpop.permute.xlu0 %739
    %v742 = vmul.f32 %v725, %v717
    %v743 = vmul.f32 %v730, %v717
    %v744 = vmul.f32 %v735, %v717
    %v745 = vmul.f32 %v740, %v717
    %v746 = vld [vmem:[%s5] sm:$0xff]
    %v747 = vld [vmem:[%s5 + $0x8] sm:$0xff]
    %v748 = vld [vmem:[%s5 + $0x10] sm:$0xff]
    %v749 = vld [vmem:[%s5 + $0x18] sm:$0xff]
    %751 = vset.pattern.permute.xlu0 0
    %752 = vperm.xlu0 %751, %v746
    %v753 = vpop.permute.xlu0 %752
    %756 = vset.pattern.permute.xlu0 0
    %757 = vperm.xlu0 %756, %v747
    %v758 = vpop.permute.xlu0 %757
    %761 = vset.pattern.permute.xlu0 0
    %762 = vperm.xlu0 %761, %v748
    %v763 = vpop.permute.xlu0 %762
    %766 = vset.pattern.permute.xlu0 0
    %767 = vperm.xlu0 %766, %v749
    %v768 = vpop.permute.xlu0 %767
    %v770 = vadd.f32 %v742, %v753
    %v771 = vadd.f32 %v743, %v758
    %v772 = vadd.f32 %v744, %v763
    %v773 = vadd.f32 %v745, %v768
    %v774 = vld [vmem:[%s6] sm:$0xf]
    %v775 = vld [vmem:[%s6 + $0x4] sm:$0xf]
    %v776 = vld [vmem:[%s6 + $0x8] sm:$0xf]
    %v777 = vld [vmem:[%s6 + $0xc] sm:$0xf]
    %v778 = vpack.c.bf16 %v771, %v770
    %v779 = vpack.c.bf16 %v773, %v772
    %v784 = vunpack.c.l.b16 %v774
    %v785 = vunpack.c.l.b16 %v775
    %v786 = vunpack.c.l.b16 %v776
    %v787 = vunpack.c.l.b16 %v777
    %v788 = vpack.c.b16 %v785, %v784
    %v789 = vpack.c.b16 %v787, %v786
    %vm790 = vcmask 261120
    %v792 = vsel %vm790, %v788, 0
    %v795 = vsel %vm790, %v789, 0
    %797 = vmatpush.bf16.msra.mxu0 0
    %798 = vmatpush.bf16.msra.mxu0 0
    %799 = vmatpush.bf16.msra.mxu0 0
    %800 = vmatpush.bf16.msra.mxu0 0
    %801 = vmatpush.bf16.msra.mxu0 0
    %802 = vmatpush.bf16.msra.mxu0 0
    %803 = vmatpush.bf16.msra.mxu0 %v779
    %804 = vmatpush.bf16.msra.mxu0 %v778
    %805 = vmatmul.bf16.gmra.mxu0 %v792
    %v806 = vpop.f32.mrf.mxu0
    %v807 = vadd.f32 0.0, %v806
    %v808 = vpop.f32.mrf.mxu0
    %v809 = vadd.f32 0.0, %v808
    %810 = vmatmul.bf16.gmra.mxu0 %v795
    %v811 = vpop.f32.mrf.mxu0
    %v812 = vadd.f32 0.0, %v811
    %v813 = vpop.f32.mrf.mxu0
    %v814 = vadd.f32 0.0, %v813
    %815 = vdwg.mxu0
    %v816 = vld [vmem:[%s7] sm:$0xff]
    %v817 = vld [vmem:[%s7 + $0x8] sm:$0xff]
    %v818 = vld [vmem:[%s7 + $0x10] sm:$0xff]
    %v819 = vld [vmem:[%s7 + $0x18] sm:$0xff]
    %v820 = vld [vmem:[%s8] sm:$0xff]
    %v821 = vld [vmem:[%s8 + $0x8] sm:$0xff]
    %v822 = vld [vmem:[%s8 + $0x10] sm:$0xff]
    %v823 = vld [vmem:[%s8 + $0x18] sm:$0xff]
    %v824 = vsel %vm501, %v807, 0.0
    %v825 = vsel %vm501, %v809, 0.0
    %v826 = vadd.f32 %v824, %v825
    %v827 = vsel %vm501, %v812, 0.0
    %v828 = vadd.f32 %v826, %v827
    %v829 = vsel %vm501, %v814, 0.0
    %v830 = vadd.f32 %v828, %v829
    %v831 = vrot.slane %v830, 4
    %v832 = vadd.f32 %v830, %v831
    %v833 = vrot.slane %v832, 2
    %v834 = vadd.f32 %v832, %v833
    %v835 = vrot.slane %v834, 1
    %v836 = vadd.f32 %v834, %v835
    %v837 = vrcp.pop 32.0
    %v838 = vmul.f32 32.0, %v837
    %v839 = vsub.f32 1.0, %v838
    %v840 = vmul.f32 %v837, %v839
    %v841 = vadd.f32 %v837, %v840
    %vm842 = vweird.f32 %v837
    %v843 = vsel %vm842, %v837, %v841
    %v844 = vmul.f32 %v836, %v843
    %v845 = vsub.f32 %v807, %v844
    %v846 = vsub.f32 %v809, %v844
    %v847 = vsub.f32 %v812, %v844
    %v848 = vsub.f32 %v814, %v844
    %v849 = vmul.f32 %v845, %v845
    %v850 = vmul.f32 %v846, %v846
    %v851 = vmul.f32 %v847, %v847
    %v852 = vmul.f32 %v848, %v848
    %v853 = vsel %vm501, %v849, 0.0
    %v854 = vsel %vm501, %v850, 0.0
    %v855 = vadd.f32 %v853, %v854
    %v856 = vsel %vm501, %v851, 0.0
    %v857 = vadd.f32 %v855, %v856
    %v858 = vsel %vm501, %v852, 0.0
    %v859 = vadd.f32 %v857, %v858
    %v860 = vrot.slane %v859, 4
    %v861 = vadd.f32 %v859, %v860
    %v862 = vrot.slane %v861, 2
    %v863 = vadd.f32 %v861, %v862
    %v864 = vrot.slane %v863, 1
    %v865 = vadd.f32 %v863, %v864
    %v866 = vmul.f32 %v865, %v843
    %v867 = vadd.f32 %v866, 1e-05
    %v868 = vrsqrt.pop %v867
    %v869 = vmul.f32 %v868, %v867
    %v870 = vmul.f32 %v869, %v868
    %v871 = vmul.f32 0.5, %v870
    %v872 = vsub.f32 1.5, %v871
    %v873 = vmul.f32 %v868, %v872
    %vm874 = vweird.f32 %v867
    %vm875 = vweird.f32 %v868
    %vm876 = vmor %vm874, %vm875
    %v877 = vsel %vm876, %v868, %v873
    %v878 = vmul.f32 %v845, %v877
    %v879 = vmul.f32 %v846, %v877
    %v880 = vmul.f32 %v847, %v877
    %v881 = vmul.f32 %v848, %v877
    %883 = vset.pattern.permute.xlu0 0
    %884 = vperm.xlu0 %883, %v816
    %v885 = vpop.permute.xlu0 %884
    %888 = vset.pattern.permute.xlu0 0
    %889 = vperm.xlu0 %888, %v817
    %v890 = vpop.permute.xlu0 %889
    %893 = vset.pattern.permute.xlu0 0
    %894 = vperm.xlu0 %893, %v818
    %v895 = vpop.permute.xlu0 %894
    %898 = vset.pattern.permute.xlu0 0
    %899 = vperm.xlu0 %898, %v819
    %v900 = vpop.permute.xlu0 %899
    %v902 = vmul.f32 %v878, %v885
    %v903 = vmul.f32 %v879, %v890
    %v904 = vmul.f32 %v880, %v895
    %v905 = vmul.f32 %v881, %v900
    %907 = vset.pattern.permute.xlu0 0
    %908 = vperm.xlu0 %907, %v820
    %v909 = vpop.permute.xlu0 %908
    %912 = vset.pattern.permute.xlu0 0
    %913 = vperm.xlu0 %912, %v821
    %v914 = vpop.permute.xlu0 %913
    %917 = vset.pattern.permute.xlu0 0
    %918 = vperm.xlu0 %917, %v822
    %v919 = vpop.permute.xlu0 %918
    %922 = vset.pattern.permute.xlu0 0
    %923 = vperm.xlu0 %922, %v823
    %v924 = vpop.permute.xlu0 %923
    %v926 = vadd.f32 %v902, %v909
    %v927 = vadd.f32 %v903, %v914
    %v928 = vadd.f32 %v904, %v919
    %v929 = vadd.f32 %v905, %v924
    %v930 = vld [vmem:[%s9] sm:$0xf]
    %v931 = vld [vmem:[%s9 + $0x4] sm:$0xf]
    %v932 = vld [vmem:[%s9 + $0x8] sm:$0xf]
    %v933 = vld [vmem:[%s9 + $0xc] sm:$0xf]
    %v934 = vld [vmem:[%s9 + $0x10] sm:$0xf]
    %v935 = vld [vmem:[%s9 + $0x14] sm:$0xf]
    %v936 = vld [vmem:[%s9 + $0x18] sm:$0xf]
    %v937 = vld [vmem:[%s9 + $0x1c] sm:$0xf]
    %v938 = vpack.c.bf16 %v927, %v926
    %v939 = vpack.c.bf16 %v929, %v928
    %v940 = vld [vmem:[%s10] sm:$0xff]
    %v941 = vld [vmem:[%s10 + $0x8] sm:$0xff]
    %v942 = vld [vmem:[%s10 + $0x10] sm:$0xff]
    %v943 = vld [vmem:[%s10 + $0x18] sm:$0xff]
    %v944 = vld [vmem:[%s10 + $0x20] sm:$0xff]
    %v945 = vld [vmem:[%s10 + $0x28] sm:$0xff]
    %v946 = vld [vmem:[%s10 + $0x30] sm:$0xff]
    %v947 = vld [vmem:[%s10 + $0x38] sm:$0xff]
    %949 = vset.pattern.permute.xlu0 0
    %950 = vperm.xlu0 %949, %v940
    %v951 = vpop.permute.xlu0 %950
    %954 = vset.pattern.permute.xlu0 0
    %955 = vperm.xlu0 %954, %v941
    %v956 = vpop.permute.xlu0 %955
    %959 = vset.pattern.permute.xlu0 0
    %960 = vperm.xlu0 %959, %v942
    %v961 = vpop.permute.xlu0 %960
    %964 = vset.pattern.permute.xlu0 0
    %965 = vperm.xlu0 %964, %v943
    %v966 = vpop.permute.xlu0 %965
    %969 = vset.pattern.permute.xlu0 0
    %970 = vperm.xlu0 %969, %v944
    %v971 = vpop.permute.xlu0 %970
    %974 = vset.pattern.permute.xlu0 0
    %975 = vperm.xlu0 %974, %v945
    %v976 = vpop.permute.xlu0 %975
    %979 = vset.pattern.permute.xlu0 0
    %980 = vperm.xlu0 %979, %v946
    %v981 = vpop.permute.xlu0 %980
    %984 = vset.pattern.permute.xlu0 0
    %985 = vperm.xlu0 %984, %v947
    %v986 = vpop.permute.xlu0 %985
    %v996 = vunpack.c.l.b16 %v930
    %v997 = vunpack.c.l.b16 %v931
    %v998 = vunpack.c.l.b16 %v932
    %v999 = vunpack.c.l.b16 %v933
    %v1000 = vunpack.c.l.b16 %v934
    %v1001 = vunpack.c.l.b16 %v935
    %v1002 = vunpack.c.l.b16 %v936
    %v1003 = vunpack.c.l.b16 %v937
    %v1004 = vpack.c.b16 %v997, %v996
    %v1005 = vpack.c.b16 %v999, %v998
    %v1006 = vpack.c.b16 %v1001, %v1000
    %v1007 = vpack.c.b16 %v1003, %v1002
    %v1009 = vsel %vm790, %v1004, 0
    %v1012 = vsel %vm790, %v1005, 0
    %v1015 = vsel %vm790, %v1006, 0
    %v1018 = vsel %vm790, %v1007, 0
    %1020 = vmatpush.bf16.msra.mxu0 0
    %1021 = vmatpush.bf16.msra.mxu0 0
    %1022 = vmatpush.bf16.msra.mxu0 0
    %1023 = vmatpush.bf16.msra.mxu0 0
    %1024 = vmatpush.bf16.msra.mxu0 0
    %1025 = vmatpush.bf16.msra.mxu0 0
    %1026 = vmatpush.bf16.msra.mxu0 %v939
    %1027 = vmatpush.bf16.msra.mxu0 %v938
    %1028 = vmatmul.bf16.gmra.mxu0 %v1009
    %v1029 = vpop.f32.mrf.mxu0
    %v1030 = vadd.f32 %v951, %v1029
    %v1031 = vpop.f32.mrf.mxu0
    %v1032 = vadd.f32 %v956, %v1031
    %1033 = vmatmul.bf16.gmra.mxu0 %v1012
    %v1034 = vpop.f32.mrf.mxu0
    %v1035 = vadd.f32 %v961, %v1034
    %v1036 = vpop.f32.mrf.mxu0
    %v1037 = vadd.f32 %v966, %v1036
    %1038 = vmatmul.bf16.gmra.mxu0 %v1015
    %v1039 = vpop.f32.mrf.mxu0
    %v1040 = vadd.f32 %v971, %v1039
    %v1041 = vpop.f32.mrf.mxu0
    %v1042 = vadd.f32 %v976, %v1041
    %1043 = vmatmul.bf16.gmra.mxu0 %v1018
    %v1044 = vpop.f32.mrf.mxu0
    %v1045 = vadd.f32 %v981, %v1044
    %v1046 = vpop.f32.mrf.mxu0
    %v1047 = vadd.f32 %v986, %v1046
    %1048 = vdwg.mxu0
    %v1049 = vmax.f32 %v1030, 0.0
    %v1050 = vmax.f32 %v1032, 0.0
    %v1051 = vmax.f32 %v1035, 0.0
    %v1052 = vmax.f32 %v1037, 0.0
    %v1053 = vmax.f32 %v1040, 0.0
    %v1054 = vmax.f32 %v1042, 0.0
    %v1055 = vmax.f32 %v1045, 0.0
    %v1056 = vmax.f32 %v1047, 0.0
    %v1057 = vld [vmem:[%s11] sm:$0xf]
    %v1058 = vld [vmem:[%s11 + $0x4] sm:$0xf]
    %v1059 = vld [vmem:[%s11 + $0x8] sm:$0xf]
    %v1060 = vld [vmem:[%s11 + $0xc] sm:$0xf]
    %v1061 = vpack.c.bf16 %v1050, %v1049
    %v1062 = vpack.c.bf16 %v1052, %v1051
    %v1063 = vpack.c.bf16 %v1054, %v1053
    %v1064 = vpack.c.bf16 %v1056, %v1055
    %v1065 = vld [vmem:[%s12] sm:$0xff]
    %v1066 = vld [vmem:[%s12 + $0x8] sm:$0xff]
    %v1067 = vld [vmem:[%s12 + $0x10] sm:$0xff]
    %v1068 = vld [vmem:[%s12 + $0x18] sm:$0xff]
    %1070 = vset.pattern.permute.xlu0 0
    %1071 = vperm.xlu0 %1070, %v1065
    %v1072 = vpop.permute.xlu0 %1071
    %1075 = vset.pattern.permute.xlu0 0
    %1076 = vperm.xlu0 %1075, %v1066
    %v1077 = vpop.permute.xlu0 %1076
    %1080 = vset.pattern.permute.xlu0 0
    %1081 = vperm.xlu0 %1080, %v1067
    %v1082 = vpop.permute.xlu0 %1081
    %1085 = vset.pattern.permute.xlu0 0
    %1086 = vperm.xlu0 %1085, %v1068
    %v1087 = vpop.permute.xlu0 %1086
    %v1093 = vunpack.c.l.b16 %v1057
    %v1094 = vunpack.c.l.b16 %v1058
    %v1095 = vunpack.c.l.b16 %v1059
    %v1096 = vunpack.c.l.b16 %v1060
    %v1097 = vpack.c.b16 %v1094, %v1093
    %v1098 = vpack.c.b16 %v1096, %v1095
    %vm1099 = vcmask 523264
    %v1101 = vsel %vm1099, %v1097, 0
    %v1104 = vsel %vm1099, %v1098, 0
    %1106 = vmatpush.bf16.msra.mxu0 0
    %1107 = vmatpush.bf16.msra.mxu0 0
    %1108 = vmatpush.bf16.msra.mxu0 0
    %1109 = vmatpush.bf16.msra.mxu0 0
    %1110 = vmatpush.bf16.msra.mxu0 %v1064
    %1111 = vmatpush.bf16.msra.mxu0 %v1063
    %1112 = vmatpush.bf16.msra.mxu0 %v1062
    %1113 = vmatpush.bf16.msra.mxu0 %v1061
    %1114 = vmatmul.bf16.gmra.mxu0 %v1101
    %v1115 = vpop.f32.mrf.mxu0
    %v1116 = vadd.f32 %v1072, %v1115
    %v1117 = vpop.f32.mrf.mxu0
    %v1118 = vadd.f32 %v1077, %v1117
    %1119 = vmatmul.bf16.gmra.mxu0 %v1104
    %v1120 = vpop.f32.mrf.mxu0
    %v1121 = vadd.f32 %v1082, %v1120
    %v1122 = vpop.f32.mrf.mxu0
    %v1123 = vadd.f32 %v1087, %v1122
    %1124 = vdwg.mxu0
    %v1125 = vadd.f32 %v926, %v1116
    %v1126 = vadd.f32 %v927, %v1118
    %v1127 = vadd.f32 %v928, %v1121
    %v1128 = vadd.f32 %v929, %v1123
    %v1129 = vld [vmem:[%s13] sm:$0xff]
    %v1130 = vld [vmem:[%s13 + $0x8] sm:$0xff]
    %v1131 = vld [vmem:[%s13 + $0x10] sm:$0xff]
    %v1132 = vld [vmem:[%s13 + $0x18] sm:$0xff]
    %v1133 = vld [vmem:[%s14] sm:$0xff]
    %v1134 = vld [vmem:[%s14 + $0x8] sm:$0xff]
    %v1135 = vld [vmem:[%s14 + $0x10] sm:$0xff]
    %v1136 = vld [vmem:[%s14 + $0x18] sm:$0xff]
    %v1137 = vsel %vm501, %v1125, 0.0
    %v1138 = vsel %vm501, %v1126, 0.0
    %v1139 = vadd.f32 %v1137, %v1138
    %v1140 = vsel %vm501, %v1127, 0.0
    %v1141 = vadd.f32 %v1139, %v1140
    %v1142 = vsel %vm501, %v1128, 0.0
    %v1143 = vadd.f32 %v1141, %v1142
    %v1144 = vrot.slane %v1143, 4
    %v1145 = vadd.f32 %v1143, %v1144
    %v1146 = vrot.slane %v1145, 2
    %v1147 = vadd.f32 %v1145, %v1146
    %v1148 = vrot.slane %v1147, 1
    %v1149 = vadd.f32 %v1147, %v1148
    %v1150 = vmul.f32 %v1149, %v843
    %v1151 = vsub.f32 %v1125, %v1150
    %v1152 = vsub.f32 %v1126, %v1150
    %v1153 = vsub.f32 %v1127, %v1150
    %v1154 = vsub.f32 %v1128, %v1150
    %v1155 = vmul.f32 %v1151, %v1151
    %v1156 = vmul.f32 %v1152, %v1152
    %v1157 = vmul.f32 %v1153, %v1153
    %v1158 = vmul.f32 %v1154, %v1154
    %v1159 = vsel %vm501, %v1155, 0.0
    %v1160 = vsel %vm501, %v1156, 0.0
    %v1161 = vadd.f32 %v1159, %v1160
    %v1162 = vsel %vm501, %v1157, 0.0
    %v1163 = vadd.f32 %v1161, %v1162
    %v1164 = vsel %vm501, %v1158, 0.0
    %v1165 = vadd.f32 %v1163, %v1164
    %v1166 = vrot.slane %v1165, 4
    %v1167 = vadd.f32 %v1165, %v1166
    %v1168 = vrot.slane %v1167, 2
    %v1169 = vadd.f32 %v1167, %v1168
    %v1170 = vrot.slane %v1169, 1
    %v1171 = vadd.f32 %v1169, %v1170
    %v1172 = vmul.f32 %v1171, %v843
    %v1173 = vadd.f32 %v1172, 1e-05
    %v1174 = vrsqrt.pop %v1173
    %v1175 = vmul.f32 %v1174, %v1173
    %v1176 = vmul.f32 %v1175, %v1174
    %v1177 = vmul.f32 0.5, %v1176
    %v1178 = vsub.f32 1.5, %v1177
    %v1179 = vmul.f32 %v1174, %v1178
    %vm1180 = vweird.f32 %v1173
    %vm1181 = vweird.f32 %v1174
    %vm1182 = vmor %vm1180, %vm1181
    %v1183 = vsel %vm1182, %v1174, %v1179
    %v1184 = vmul.f32 %v1151, %v1183
    %v1185 = vmul.f32 %v1152, %v1183
    %v1186 = vmul.f32 %v1153, %v1183
    %v1187 = vmul.f32 %v1154, %v1183
    %1189 = vset.pattern.permute.xlu0 0
    %1190 = vperm.xlu0 %1189, %v1129
    %v1191 = vpop.permute.xlu0 %1190
    %1194 = vset.pattern.permute.xlu0 0
    %1195 = vperm.xlu0 %1194, %v1130
    %v1196 = vpop.permute.xlu0 %1195
    %1199 = vset.pattern.permute.xlu0 0
    %1200 = vperm.xlu0 %1199, %v1131
    %v1201 = vpop.permute.xlu0 %1200
    %1204 = vset.pattern.permute.xlu0 0
    %1205 = vperm.xlu0 %1204, %v1132
    %v1206 = vpop.permute.xlu0 %1205
    %v1208 = vmul.f32 %v1184, %v1191
    %v1209 = vmul.f32 %v1185, %v1196
    %v1210 = vmul.f32 %v1186, %v1201
    %v1211 = vmul.f32 %v1187, %v1206
    %1213 = vset.pattern.permute.xlu0 0
    %1214 = vperm.xlu0 %1213, %v1133
    %v1215 = vpop.permute.xlu0 %1214
    %1218 = vset.pattern.permute.xlu0 0
    %1219 = vperm.xlu0 %1218, %v1134
    %v1220 = vpop.permute.xlu0 %1219
    %1223 = vset.pattern.permute.xlu0 0
    %1224 = vperm.xlu0 %1223, %v1135
    %v1225 = vpop.permute.xlu0 %1224
    %1228 = vset.pattern.permute.xlu0 0
    %1229 = vperm.xlu0 %1228, %v1136
    %v1230 = vpop.permute.xlu0 %1229
    %v1232 = vadd.f32 %v1208, %v1215
    %v1233 = vadd.f32 %v1209, %v1220
    %v1234 = vadd.f32 %v1210, %v1225
    %v1235 = vadd.f32 %v1211, %v1230
    %s1236 = scalar_lea.vmem %s6, 16
    %v1237 = vld [vmem:[%s1236] sm:$0xf]
    %v1238 = vld [vmem:[%s1236 + $0x4] sm:$0xf]
    %v1239 = vld [vmem:[%s1236 + $0x8] sm:$0xf]
    %v1240 = vld [vmem:[%s1236 + $0xc] sm:$0xf]
    %v1241 = vpack.c.bf16 %v1233, %v1232
    %v1242 = vpack.c.bf16 %v1235, %v1234
    %v1247 = vunpack.c.l.b16 %v1237
    %v1248 = vunpack.c.l.b16 %v1238
    %v1249 = vunpack.c.l.b16 %v1239
    %v1250 = vunpack.c.l.b16 %v1240
    %v1251 = vpack.c.b16 %v1248, %v1247
    %v1252 = vpack.c.b16 %v1250, %v1249
    %v1254 = vsel %vm790, %v1251, 0
    %v1257 = vsel %vm790, %v1252, 0
    %1259 = vmatpush.bf16.msra.mxu0 0
    %1260 = vmatpush.bf16.msra.mxu0 0
    %1261 = vmatpush.bf16.msra.mxu0 0
    %1262 = vmatpush.bf16.msra.mxu0 0
    %1263 = vmatpush.bf16.msra.mxu0 0
    %1264 = vmatpush.bf16.msra.mxu0 0
    %1265 = vmatpush.bf16.msra.mxu0 %v1242
    %1266 = vmatpush.bf16.msra.mxu0 %v1241
    %1267 = vmatmul.bf16.gmra.mxu0 %v1254
    %v1268 = vpop.f32.mrf.mxu0
    %v1269 = vadd.f32 0.0, %v1268
    %v1270 = vpop.f32.mrf.mxu0
    %v1271 = vadd.f32 0.0, %v1270
    %1272 = vmatmul.bf16.gmra.mxu0 %v1257
    %v1273 = vpop.f32.mrf.mxu0
    %v1274 = vadd.f32 0.0, %v1273
    %v1275 = vpop.f32.mrf.mxu0
    %v1276 = vadd.f32 0.0, %v1275
    %1277 = vdwg.mxu0
    %s1278 = scalar_lea.vmem %s7, 32
    %v1279 = vld [vmem:[%s1278] sm:$0xff]
    %v1280 = vld [vmem:[%s1278 + $0x8] sm:$0xff]
    %v1281 = vld [vmem:[%s1278 + $0x10] sm:$0xff]
    %v1282 = vld [vmem:[%s1278 + $0x18] sm:$0xff]
    %s1283 = scalar_lea.vmem %s8, 32
    %v1284 = vld [vmem:[%s1283] sm:$0xff]
    %v1285 = vld [vmem:[%s1283 + $0x8] sm:$0xff]
    %v1286 = vld [vmem:[%s1283 + $0x10] sm:$0xff]
    %v1287 = vld [vmem:[%s1283 + $0x18] sm:$0xff]
    %v1288 = vsel %vm501, %v1269, 0.0
    %v1289 = vsel %vm501, %v1271, 0.0
    %v1290 = vadd.f32 %v1288, %v1289
    %v1291 = vsel %vm501, %v1274, 0.0
    %v1292 = vadd.f32 %v1290, %v1291
    %v1293 = vsel %vm501, %v1276, 0.0
    %v1294 = vadd.f32 %v1292, %v1293
    %v1295 = vrot.slane %v1294, 4
    %v1296 = vadd.f32 %v1294, %v1295
    %v1297 = vrot.slane %v1296, 2
    %v1298 = vadd.f32 %v1296, %v1297
    %v1299 = vrot.slane %v1298, 1
    %v1300 = vadd.f32 %v1298, %v1299
    %v1301 = vmul.f32 %v1300, %v843
    %v1302 = vsub.f32 %v1269, %v1301
    %v1303 = vsub.f32 %v1271, %v1301
    %v1304 = vsub.f32 %v1274, %v1301
    %v1305 = vsub.f32 %v1276, %v1301
    %v1306 = vmul.f32 %v1302, %v1302
    %v1307 = vmul.f32 %v1303, %v1303
    %v1308 = vmul.f32 %v1304, %v1304
    %v1309 = vmul.f32 %v1305, %v1305
    %v1310 = vsel %vm501, %v1306, 0.0
    %v1311 = vsel %vm501, %v1307, 0.0
    %v1312 = vadd.f32 %v1310, %v1311
    %v1313 = vsel %vm501, %v1308, 0.0
    %v1314 = vadd.f32 %v1312, %v1313
    %v1315 = vsel %vm501, %v1309, 0.0
    %v1316 = vadd.f32 %v1314, %v1315
    %v1317 = vrot.slane %v1316, 4
    %v1318 = vadd.f32 %v1316, %v1317
    %v1319 = vrot.slane %v1318, 2
    %v1320 = vadd.f32 %v1318, %v1319
    %v1321 = vrot.slane %v1320, 1
    %v1322 = vadd.f32 %v1320, %v1321
    %v1323 = vmul.f32 %v1322, %v843
    %v1324 = vadd.f32 %v1323, 1e-05
    %v1325 = vrsqrt.pop %v1324
    %v1326 = vmul.f32 %v1325, %v1324
    %v1327 = vmul.f32 %v1326, %v1325
    %v1328 = vmul.f32 0.5, %v1327
    %v1329 = vsub.f32 1.5, %v1328
    %v1330 = vmul.f32 %v1325, %v1329
    %vm1331 = vweird.f32 %v1324
    %vm1332 = vweird.f32 %v1325
    %vm1333 = vmor %vm1331, %vm1332
    %v1334 = vsel %vm1333, %v1325, %v1330
    %v1335 = vmul.f32 %v1302, %v1334
    %v1336 = vmul.f32 %v1303, %v1334
    %v1337 = vmul.f32 %v1304, %v1334
    %v1338 = vmul.f32 %v1305, %v1334
    %1340 = vset.pattern.permute.xlu0 0
    %1341 = vperm.xlu0 %1340, %v1279
    %v1342 = vpop.permute.xlu0 %1341
    %1345 = vset.pattern.permute.xlu0 0
    %1346 = vperm.xlu0 %1345, %v1280
    %v1347 = vpop.permute.xlu0 %1346
    %1350 = vset.pattern.permute.xlu0 0
    %1351 = vperm.xlu0 %1350, %v1281
    %v1352 = vpop.permute.xlu0 %1351
    %1355 = vset.pattern.permute.xlu0 0
    %1356 = vperm.xlu0 %1355, %v1282
    %v1357 = vpop.permute.xlu0 %1356
    %v1359 = vmul.f32 %v1335, %v1342
    %v1360 = vmul.f32 %v1336, %v1347
    %v1361 = vmul.f32 %v1337, %v1352
    %v1362 = vmul.f32 %v1338, %v1357
    %1364 = vset.pattern.permute.xlu0 0
    %1365 = vperm.xlu0 %1364, %v1284
    %v1366 = vpop.permute.xlu0 %1365
    %1369 = vset.pattern.permute.xlu0 0
    %1370 = vperm.xlu0 %1369, %v1285
    %v1371 = vpop.permute.xlu0 %1370
    %1374 = vset.pattern.permute.xlu0 0
    %1375 = vperm.xlu0 %1374, %v1286
    %v1376 = vpop.permute.xlu0 %1375
    %1379 = vset.pattern.permute.xlu0 0
    %1380 = vperm.xlu0 %1379, %v1287
    %v1381 = vpop.permute.xlu0 %1380
    %v1383 = vadd.f32 %v1359, %v1366
    %v1384 = vadd.f32 %v1360, %v1371
    %v1385 = vadd.f32 %v1361, %v1376
    %v1386 = vadd.f32 %v1362, %v1381
    %s1387 = scalar_lea.vmem %s9, 32
    %v1388 = vld [vmem:[%s1387] sm:$0xf]
    %v1389 = vld [vmem:[%s1387 + $0x4] sm:$0xf]
    %v1390 = vld [vmem:[%s1387 + $0x8] sm:$0xf]
    %v1391 = vld [vmem:[%s1387 + $0xc] sm:$0xf]
    %v1392 = vld [vmem:[%s1387 + $0x10] sm:$0xf]
    %v1393 = vld [vmem:[%s1387 + $0x14] sm:$0xf]
    %v1394 = vld [vmem:[%s1387 + $0x18] sm:$0xf]
    %v1395 = vld [vmem:[%s1387 + $0x1c] sm:$0xf]
    %v1396 = vpack.c.bf16 %v1384, %v1383
    %v1397 = vpack.c.bf16 %v1386, %v1385
    %s1398 = scalar_lea.vmem %s10, 64
    %v1399 = vld [vmem:[%s1398] sm:$0xff]
    %v1400 = vld [vmem:[%s1398 + $0x8] sm:$0xff]
    %v1401 = vld [vmem:[%s1398 + $0x10] sm:$0xff]
    %v1402 = vld [vmem:[%s1398 + $0x18] sm:$0xff]
    %v1403 = vld [vmem:[%s1398 + $0x20] sm:$0xff]
    %v1404 = vld [vmem:[%s1398 + $0x28] sm:$0xff]
    %v1405 = vld [vmem:[%s1398 + $0x30] sm:$0xff]
    %v1406 = vld [vmem:[%s1398 + $0x38] sm:$0xff]
    %1408 = vset.pattern.permute.xlu0 0
    %1409 = vperm.xlu0 %1408, %v1399
    %v1410 = vpop.permute.xlu0 %1409
    %1413 = vset.pattern.permute.xlu0 0
    %1414 = vperm.xlu0 %1413, %v1400
    %v1415 = vpop.permute.xlu0 %1414
    %1418 = vset.pattern.permute.xlu0 0
    %1419 = vperm.xlu0 %1418, %v1401
    %v1420 = vpop.permute.xlu0 %1419
    %1423 = vset.pattern.permute.xlu0 0
    %1424 = vperm.xlu0 %1423, %v1402
    %v1425 = vpop.permute.xlu0 %1424
    %1428 = vset.pattern.permute.xlu0 0
    %1429 = vperm.xlu0 %1428, %v1403
    %v1430 = vpop.permute.xlu0 %1429
    %1433 = vset.pattern.permute.xlu0 0
    %1434 = vperm.xlu0 %1433, %v1404
    %v1435 = vpop.permute.xlu0 %1434
    %1438 = vset.pattern.permute.xlu0 0
    %1439 = vperm.xlu0 %1438, %v1405
    %v1440 = vpop.permute.xlu0 %1439
    %1443 = vset.pattern.permute.xlu0 0
    %1444 = vperm.xlu0 %1443, %v1406
    %v1445 = vpop.permute.xlu0 %1444
    %v1455 = vunpack.c.l.b16 %v1388
    %v1456 = vunpack.c.l.b16 %v1389
    %v1457 = vunpack.c.l.b16 %v1390
    %v1458 = vunpack.c.l.b16 %v1391
    %v1459 = vunpack.c.l.b16 %v1392
    %v1460 = vunpack.c.l.b16 %v1393
    %v1461 = vunpack.c.l.b16 %v1394
    %v1462 = vunpack.c.l.b16 %v1395
    %v1463 = vpack.c.b16 %v1456, %v1455
    %v1464 = vpack.c.b16 %v1458, %v1457
    %v1465 = vpack.c.b16 %v1460, %v1459
    %v1466 = vpack.c.b16 %v1462, %v1461
    %v1468 = vsel %vm790, %v1463, 0
    %v1471 = vsel %vm790, %v1464, 0
    %v1474 = vsel %vm790, %v1465, 0
    %v1477 = vsel %vm790, %v1466, 0
    %1479 = vmatpush.bf16.msra.mxu0 0
    %1480 = vmatpush.bf16.msra.mxu0 0
    %1481 = vmatpush.bf16.msra.mxu0 0
    %1482 = vmatpush.bf16.msra.mxu0 0
    %1483 = vmatpush.bf16.msra.mxu0 0
    %1484 = vmatpush.bf16.msra.mxu0 0
    %1485 = vmatpush.bf16.msra.mxu0 %v1397
    %1486 = vmatpush.bf16.msra.mxu0 %v1396
    %1487 = vmatmul.bf16.gmra.mxu0 %v1468
    %v1488 = vpop.f32.mrf.mxu0
    %v1489 = vadd.f32 %v1410, %v1488
    %v1490 = vpop.f32.mrf.mxu0
    %v1491 = vadd.f32 %v1415, %v1490
    %1492 = vmatmul.bf16.gmra.mxu0 %v1471
    %v1493 = vpop.f32.mrf.mxu0
    %v1494 = vadd.f32 %v1420, %v1493
    %v1495 = vpop.f32.mrf.mxu0
    %v1496 = vadd.f32 %v1425, %v1495
    %1497 = vmatmul.bf16.gmra.mxu0 %v1474
    %v1498 = vpop.f32.mrf.mxu0
    %v1499 = vadd.f32 %v1430, %v1498
    %v1500 = vpop.f32.mrf.mxu0
    %v1501 = vadd.f32 %v1435, %v1500
    %1502 = vmatmul.bf16.gmra.mxu0 %v1477
    %v1503 = vpop.f32.mrf.mxu0
    %v1504 = vadd.f32 %v1440, %v1503
    %v1505 = vpop.f32.mrf.mxu0
    %v1506 = vadd.f32 %v1445, %v1505
    %1507 = vdwg.mxu0
    %v1508 = vmax.f32 %v1489, 0.0
    %v1509 = vmax.f32 %v1491, 0.0
    %v1510 = vmax.f32 %v1494, 0.0
    %v1511 = vmax.f32 %v1496, 0.0
    %v1512 = vmax.f32 %v1499, 0.0
    %v1513 = vmax.f32 %v1501, 0.0
    %v1514 = vmax.f32 %v1504, 0.0
    %v1515 = vmax.f32 %v1506, 0.0
    %s1516 = scalar_lea.vmem %s11, 16
    %v1517 = vld [vmem:[%s1516] sm:$0xf]
    %v1518 = vld [vmem:[%s1516 + $0x4] sm:$0xf]
    %v1519 = vld [vmem:[%s1516 + $0x8] sm:$0xf]
    %v1520 = vld [vmem:[%s1516 + $0xc] sm:$0xf]
    %v1521 = vpack.c.bf16 %v1509, %v1508
    %v1522 = vpack.c.bf16 %v1511, %v1510
    %v1523 = vpack.c.bf16 %v1513, %v1512
    %v1524 = vpack.c.bf16 %v1515, %v1514
    %s1525 = scalar_lea.vmem %s12, 32
    %v1526 = vld [vmem:[%s1525] sm:$0xff]
    %v1527 = vld [vmem:[%s1525 + $0x8] sm:$0xff]
    %v1528 = vld [vmem:[%s1525 + $0x10] sm:$0xff]
    %v1529 = vld [vmem:[%s1525 + $0x18] sm:$0xff]
    %1531 = vset.pattern.permute.xlu0 0
    %1532 = vperm.xlu0 %1531, %v1526
    %v1533 = vpop.permute.xlu0 %1532
    %1536 = vset.pattern.permute.xlu0 0
    %1537 = vperm.xlu0 %1536, %v1527
    %v1538 = vpop.permute.xlu0 %1537
    %1541 = vset.pattern.permute.xlu0 0
    %1542 = vperm.xlu0 %1541, %v1528
    %v1543 = vpop.permute.xlu0 %1542
    %1546 = vset.pattern.permute.xlu0 0
    %1547 = vperm.xlu0 %1546, %v1529
    %v1548 = vpop.permute.xlu0 %1547
    %v1554 = vunpack.c.l.b16 %v1517
    %v1555 = vunpack.c.l.b16 %v1518
    %v1556 = vunpack.c.l.b16 %v1519
    %v1557 = vunpack.c.l.b16 %v1520
    %v1558 = vpack.c.b16 %v1555, %v1554
    %v1559 = vpack.c.b16 %v1557, %v1556
    %v1561 = vsel %vm1099, %v1558, 0
    %v1564 = vsel %vm1099, %v1559, 0
    %1566 = vmatpush.bf16.msra.mxu0 0
    %1567 = vmatpush.bf16.msra.mxu0 0
    %1568 = vmatpush.bf16.msra.mxu0 0
    %1569 = vmatpush.bf16.msra.mxu0 0
    %1570 = vmatpush.bf16.msra.mxu0 %v1524
    %1571 = vmatpush.bf16.msra.mxu0 %v1523
    %1572 = vmatpush.bf16.msra.mxu0 %v1522
    %1573 = vmatpush.bf16.msra.mxu0 %v1521
    %1574 = vmatmul.bf16.gmra.mxu0 %v1561
    %v1575 = vpop.f32.mrf.mxu0
    %v1576 = vadd.f32 %v1533, %v1575
    %v1577 = vpop.f32.mrf.mxu0
    %v1578 = vadd.f32 %v1538, %v1577
    %1579 = vmatmul.bf16.gmra.mxu0 %v1564
    %v1580 = vpop.f32.mrf.mxu0
    %v1581 = vadd.f32 %v1543, %v1580
    %v1582 = vpop.f32.mrf.mxu0
    %v1583 = vadd.f32 %v1548, %v1582
    %1584 = vdwg.mxu0
    %v1585 = vadd.f32 %v1383, %v1576
    %v1586 = vadd.f32 %v1384, %v1578
    %v1587 = vadd.f32 %v1385, %v1581
    %v1588 = vadd.f32 %v1386, %v1583
    %s1589 = scalar_lea.vmem %s13, 32
    %v1590 = vld [vmem:[%s1589] sm:$0xff]
    %v1591 = vld [vmem:[%s1589 + $0x8] sm:$0xff]
    %v1592 = vld [vmem:[%s1589 + $0x10] sm:$0xff]
    %v1593 = vld [vmem:[%s1589 + $0x18] sm:$0xff]
    %s1594 = scalar_lea.vmem %s14, 32
    %v1595 = vld [vmem:[%s1594] sm:$0xff]
    %v1596 = vld [vmem:[%s1594 + $0x8] sm:$0xff]
    %v1597 = vld [vmem:[%s1594 + $0x10] sm:$0xff]
    %v1598 = vld [vmem:[%s1594 + $0x18] sm:$0xff]
    %v1599 = vsel %vm501, %v1585, 0.0
    %v1600 = vsel %vm501, %v1586, 0.0
    %v1601 = vadd.f32 %v1599, %v1600
    %v1602 = vsel %vm501, %v1587, 0.0
    %v1603 = vadd.f32 %v1601, %v1602
    %v1604 = vsel %vm501, %v1588, 0.0
    %v1605 = vadd.f32 %v1603, %v1604
    %v1606 = vrot.slane %v1605, 4
    %v1607 = vadd.f32 %v1605, %v1606
    %v1608 = vrot.slane %v1607, 2
    %v1609 = vadd.f32 %v1607, %v1608
    %v1610 = vrot.slane %v1609, 1
    %v1611 = vadd.f32 %v1609, %v1610
    %v1612 = vmul.f32 %v1611, %v843
    %v1613 = vsub.f32 %v1585, %v1612
    %v1614 = vsub.f32 %v1586, %v1612
    %v1615 = vsub.f32 %v1587, %v1612
    %v1616 = vsub.f32 %v1588, %v1612
    %v1617 = vmul.f32 %v1613, %v1613
    %v1618 = vmul.f32 %v1614, %v1614
    %v1619 = vmul.f32 %v1615, %v1615
    %v1620 = vmul.f32 %v1616, %v1616
    %v1621 = vsel %vm501, %v1617, 0.0
    %v1622 = vsel %vm501, %v1618, 0.0
    %v1623 = vadd.f32 %v1621, %v1622
    %v1624 = vsel %vm501, %v1619, 0.0
    %v1625 = vadd.f32 %v1623, %v1624
    %v1626 = vsel %vm501, %v1620, 0.0
    %v1627 = vadd.f32 %v1625, %v1626
    %v1628 = vrot.slane %v1627, 4
    %v1629 = vadd.f32 %v1627, %v1628
    %v1630 = vrot.slane %v1629, 2
    %v1631 = vadd.f32 %v1629, %v1630
    %v1632 = vrot.slane %v1631, 1
    %v1633 = vadd.f32 %v1631, %v1632
    %v1634 = vmul.f32 %v1633, %v843
    %v1635 = vadd.f32 %v1634, 1e-05
    %v1636 = vrsqrt.pop %v1635
    %v1637 = vmul.f32 %v1636, %v1635
    %v1638 = vmul.f32 %v1637, %v1636
    %v1639 = vmul.f32 0.5, %v1638
    %v1640 = vsub.f32 1.5, %v1639
    %v1641 = vmul.f32 %v1636, %v1640
    %vm1642 = vweird.f32 %v1635
    %vm1643 = vweird.f32 %v1636
    %vm1644 = vmor %vm1642, %vm1643
    %v1645 = vsel %vm1644, %v1636, %v1641
    %v1646 = vmul.f32 %v1613, %v1645
    %v1647 = vmul.f32 %v1614, %v1645
    %v1648 = vmul.f32 %v1615, %v1645
    %v1649 = vmul.f32 %v1616, %v1645
    %1651 = vset.pattern.permute.xlu0 0
    %1652 = vperm.xlu0 %1651, %v1590
    %v1653 = vpop.permute.xlu0 %1652
    %1656 = vset.pattern.permute.xlu0 0
    %1657 = vperm.xlu0 %1656, %v1591
    %v1658 = vpop.permute.xlu0 %1657
    %1661 = vset.pattern.permute.xlu0 0
    %1662 = vperm.xlu0 %1661, %v1592
    %v1663 = vpop.permute.xlu0 %1662
    %1666 = vset.pattern.permute.xlu0 0
    %1667 = vperm.xlu0 %1666, %v1593
    %v1668 = vpop.permute.xlu0 %1667
    %v1670 = vmul.f32 %v1646, %v1653
    %v1671 = vmul.f32 %v1647, %v1658
    %v1672 = vmul.f32 %v1648, %v1663
    %v1673 = vmul.f32 %v1649, %v1668
    %1675 = vset.pattern.permute.xlu0 0
    %1676 = vperm.xlu0 %1675, %v1595
    %v1677 = vpop.permute.xlu0 %1676
    %1680 = vset.pattern.permute.xlu0 0
    %1681 = vperm.xlu0 %1680, %v1596
    %v1682 = vpop.permute.xlu0 %1681
    %1685 = vset.pattern.permute.xlu0 0
    %1686 = vperm.xlu0 %1685, %v1597
    %v1687 = vpop.permute.xlu0 %1686
    %1690 = vset.pattern.permute.xlu0 0
    %1691 = vperm.xlu0 %1690, %v1598
    %v1692 = vpop.permute.xlu0 %1691
    %v1694 = vadd.f32 %v1670, %v1677
    %v1695 = vadd.f32 %v1671, %v1682
    %v1696 = vadd.f32 %v1672, %v1687
    %v1697 = vadd.f32 %v1673, %v1692
    %v1698 = vld [vmem:[%s15] sm:$0xff]
    %v1699 = vld [vmem:[%s15 + $0x8] sm:$0xff]
    %v1700 = vld [vmem:[%s15 + $0x10] sm:$0xff]
    %v1701 = vld [vmem:[%s15 + $0x18] sm:$0xff]
    %1703 = vset.pattern.permute.xlu0 0
    %1704 = vperm.xlu0 %1703, %v1698
    %v1705 = vpop.permute.xlu0 %1704
    %1708 = vset.pattern.permute.xlu0 0
    %1709 = vperm.xlu0 %1708, %v1699
    %v1710 = vpop.permute.xlu0 %1709
    %1713 = vset.pattern.permute.xlu0 0
    %1714 = vperm.xlu0 %1713, %v1700
    %v1715 = vpop.permute.xlu0 %1714
    %1718 = vset.pattern.permute.xlu0 0
    %1719 = vperm.xlu0 %1718, %v1701
    %v1720 = vpop.permute.xlu0 %1719
    %v1722 = vmul.f32 %v1694, %v1705
    %v1723 = vmul.f32 %v1695, %v1710
    %v1724 = vmul.f32 %v1696, %v1715
    %v1725 = vmul.f32 %v1697, %v1720
    %v1726 = vsel %vm501, %v1722, 0.0
    %v1727 = vsel %vm501, %v1723, 0.0
    %v1728 = vadd.f32 %v1726, %v1727
    %v1729 = vsel %vm501, %v1724, 0.0
    %v1730 = vadd.f32 %v1728, %v1729
    %v1731 = vsel %vm501, %v1725, 0.0
    %v1732 = vadd.f32 %v1730, %v1731
    %v1733 = vrot.slane %v1732, 4
    %v1734 = vadd.f32 %v1732, %v1733
    %v1735 = vrot.slane %v1734, 2
    %v1736 = vadd.f32 %v1734, %v1735
    %v1737 = vrot.slane %v1736, 1
    %v1738 = vadd.f32 %v1736, %v1737
    %v1739 = vld [vmem:[#allocation3] sm:$0x1]
    %1741 = vset.pattern.permute.xlu0 0
    %1742 = vperm.xlu0 %1741, %v1739
    %v1743 = vpop.permute.xlu0 %1742
    %v1745 = vperm.slane %v1743, 0
    %v1746 = vadd.f32 %v1738, %v1745
    %v1747 = vld [vmem:[%s17] sm:$0xff]
    %v1748 = vld [vmem:[%s17 + $0x8] sm:$0xff]
    %v1749 = vld [vmem:[%s17 + $0x10] sm:$0xff]
    %v1750 = vld [vmem:[%s17 + $0x18] sm:$0xff]
    %1752 = vset.pattern.permute.xlu0 0
    %1753 = vperm.xlu0 %1752, %v1747
    %v1754 = vpop.permute.xlu0 %1753
    %1757 = vset.pattern.permute.xlu0 0
    %1758 = vperm.xlu0 %1757, %v1748
    %v1759 = vpop.permute.xlu0 %1758
    %1762 = vset.pattern.permute.xlu0 0
    %1763 = vperm.xlu0 %1762, %v1749
    %v1764 = vpop.permute.xlu0 %1763
    %1767 = vset.pattern.permute.xlu0 0
    %1768 = vperm.xlu0 %1767, %v1750
    %v1769 = vpop.permute.xlu0 %1768
    %v1771 = vmul.f32 %v1754, %v1746
    %v1772 = vmul.f32 %v1759, %v1746
    %v1773 = vmul.f32 %v1764, %v1746
    %v1774 = vmul.f32 %v1769, %v1746
    %v1775 = vld [vmem:[%s18] sm:$0xff]
    %v1776 = vld [vmem:[%s18 + $0x8] sm:$0xff]
    %v1777 = vld [vmem:[%s18 + $0x10] sm:$0xff]
    %v1778 = vld [vmem:[%s18 + $0x18] sm:$0xff]
    %1780 = vset.pattern.permute.xlu0 0
    %1781 = vperm.xlu0 %1780, %v1775
    %v1782 = vpop.permute.xlu0 %1781
    %1785 = vset.pattern.permute.xlu0 0
    %1786 = vperm.xlu0 %1785, %v1776
    %v1787 = vpop.permute.xlu0 %1786
    %1790 = vset.pattern.permute.xlu0 0
    %1791 = vperm.xlu0 %1790, %v1777
    %v1792 = vpop.permute.xlu0 %1791
    %1795 = vset.pattern.permute.xlu0 0
    %1796 = vperm.xlu0 %1795, %v1778
    %v1797 = vpop.permute.xlu0 %1796
    %v1799 = vadd.f32 %v1771, %v1782
    %v1800 = vadd.f32 %v1772, %v1787
    %v1801 = vadd.f32 %v1773, %v1792
    %v1802 = vadd.f32 %v1774, %v1797
    %v1803 = vmax.f32 %v1799, 0.0
    %v1804 = vmax.f32 %v1800, 0.0
    %v1805 = vmax.f32 %v1801, 0.0
    %v1806 = vmax.f32 %v1802, 0.0
    %v1807 = vld [vmem:[%s19] sm:$0xff]
    %v1808 = vld [vmem:[%s19 + $0x8] sm:$0xff]
    %v1809 = vld [vmem:[%s19 + $0x10] sm:$0xff]
    %v1810 = vld [vmem:[%s19 + $0x18] sm:$0xff]
    %1812 = vset.pattern.permute.xlu0 0
    %1813 = vperm.xlu0 %1812, %v1807
    %v1814 = vpop.permute.xlu0 %1813
    %1817 = vset.pattern.permute.xlu0 0
    %1818 = vperm.xlu0 %1817, %v1808
    %v1819 = vpop.permute.xlu0 %1818
    %1822 = vset.pattern.permute.xlu0 0
    %1823 = vperm.xlu0 %1822, %v1809
    %v1824 = vpop.permute.xlu0 %1823
    %1827 = vset.pattern.permute.xlu0 0
    %1828 = vperm.xlu0 %1827, %v1810
    %v1829 = vpop.permute.xlu0 %1828
    %v1831 = vmul.f32 %v1814, %v1803
    %v1832 = vmul.f32 %v1819, %v1804
    %v1833 = vmul.f32 %v1824, %v1805
    %v1834 = vmul.f32 %v1829, %v1806
    %v1835 = vsel %vm501, %v1831, 0.0
    %v1836 = vsel %vm501, %v1832, 0.0
    %v1837 = vadd.f32 %v1835, %v1836
    %v1838 = vsel %vm501, %v1833, 0.0
    %v1839 = vadd.f32 %v1837, %v1838
    %v1840 = vsel %vm501, %v1834, 0.0
    %v1841 = vadd.f32 %v1839, %v1840
    %v1842 = vrot.slane %v1841, 4
    %v1843 = vadd.f32 %v1841, %v1842
    %v1844 = vrot.slane %v1843, 2
    %v1845 = vadd.f32 %v1843, %v1844
    %v1846 = vrot.slane %v1845, 1
    %v1847 = vadd.f32 %v1845, %v1846
    %v1848 = vld [vmem:[#allocation4] sm:$0x1]
    %1850 = vset.pattern.permute.xlu0 0
    %1851 = vperm.xlu0 %1850, %v1848
    %v1852 = vpop.permute.xlu0 %1851
    %v1854 = vperm.slane %v1852, 0
    %v1855 = vadd.f32 %v1847, %v1854
    %v1856 = vld [vmem:[#allocation2] sm:$0x1]
    %v1857 = vadd.f32 %v1856, %v1855
    %vm1858 = vcmask 57344
    %1859 = vst.msk [vmem:[#allocation2] sm:$0x1] %vm1858, %v1857
    // Predicated region
    $region106: #{tpu_custom_call.1} parent=1 // pred_check
      %p1860 = pneg %p88
    $region107: #{tpu_custom_call.1} parent=1 // pred_check_branch
      %1862 = sbr.rel (%p1860) target = $region109
    $region108: #{tpu_custom_call.1} parent=1 // pred_region
      %v1863 = vld [vmem:[#allocation2] sm:$0x1]
      %v1864 = vmul.f32 %v1863, 0.5
      %v1865 = vld [vmem:[%s21] sm:$0xff]
      %v1866 = vld [vmem:[%s21 + $0x8] sm:$0xff]
      %v1867 = vld [vmem:[%s21 + $0x10] sm:$0xff]
      %v1868 = vld [vmem:[%s21 + $0x18] sm:$0xff]
      %1870 = vset.pattern.permute.xlu0 0
      %1871 = vperm.xlu0 %1870, %v1865
      %v1872 = vpop.permute.xlu0 %1871
      %1875 = vset.pattern.permute.xlu0 0
      %1876 = vperm.xlu0 %1875, %v1866
      %v1877 = vpop.permute.xlu0 %1876
      %1880 = vset.pattern.permute.xlu0 0
      %1881 = vperm.xlu0 %1880, %v1867
      %v1882 = vpop.permute.xlu0 %1881
      %1885 = vset.pattern.permute.xlu0 0
      %1886 = vperm.xlu0 %1885, %v1868
      %v1887 = vpop.permute.xlu0 %1886
      %v1890 = vperm.slane %v1864, 0
      %v1892 = vmul.f32 %v1872, %v1890
      %v1893 = vmul.f32 %v1877, %v1890
      %v1894 = vmul.f32 %v1882, %v1890
      %v1895 = vmul.f32 %v1887, %v1890
      %v1896 = vld [vmem:[%s22] sm:$0xff]
      %v1897 = vld [vmem:[%s22 + $0x8] sm:$0xff]
      %v1898 = vld [vmem:[%s22 + $0x10] sm:$0xff]
      %v1899 = vld [vmem:[%s22 + $0x18] sm:$0xff]
      %1901 = vset.pattern.permute.xlu0 0
      %1902 = vperm.xlu0 %1901, %v1896
      %v1903 = vpop.permute.xlu0 %1902
      %1906 = vset.pattern.permute.xlu0 0
      %1907 = vperm.xlu0 %1906, %v1897
      %v1908 = vpop.permute.xlu0 %1907
      %1911 = vset.pattern.permute.xlu0 0
      %1912 = vperm.xlu0 %1911, %v1898
      %v1913 = vpop.permute.xlu0 %1912
      %1916 = vset.pattern.permute.xlu0 0
      %1917 = vperm.xlu0 %1916, %v1899
      %v1918 = vpop.permute.xlu0 %1917
      %v1920 = vadd.f32 %v1892, %v1903
      %v1921 = vadd.f32 %v1893, %v1908
      %v1922 = vadd.f32 %v1894, %v1913
      %v1923 = vadd.f32 %v1895, %v1918
      %v1924 = vmax.f32 %v1920, 0.0
      %v1925 = vmax.f32 %v1921, 0.0
      %v1926 = vmax.f32 %v1922, 0.0
      %v1927 = vmax.f32 %v1923, 0.0
      %v1928 = vld [vmem:[%s23] sm:$0xff]
      %v1929 = vld [vmem:[%s23 + $0x8] sm:$0xff]
      %v1930 = vld [vmem:[%s23 + $0x10] sm:$0xff]
      %v1931 = vld [vmem:[%s23 + $0x18] sm:$0xff]
      %1933 = vset.pattern.permute.xlu0 0
      %1934 = vperm.xlu0 %1933, %v1928
      %v1935 = vpop.permute.xlu0 %1934
      %1938 = vset.pattern.permute.xlu0 0
      %1939 = vperm.xlu0 %1938, %v1929
      %v1940 = vpop.permute.xlu0 %1939
      %1943 = vset.pattern.permute.xlu0 0
      %1944 = vperm.xlu0 %1943, %v1930
      %v1945 = vpop.permute.xlu0 %1944
      %1948 = vset.pattern.permute.xlu0 0
      %1949 = vperm.xlu0 %1948, %v1931
      %v1950 = vpop.permute.xlu0 %1949
      %v1952 = vmul.f32 %v1935, %v1924
      %v1953 = vmul.f32 %v1940, %v1925
      %v1954 = vmul.f32 %v1945, %v1926
      %v1955 = vmul.f32 %v1950, %v1927
      %v1956 = vsel %vm501, %v1952, 0.0
      %v1957 = vsel %vm501, %v1953, 0.0
      %v1958 = vadd.f32 %v1956, %v1957
      %v1959 = vsel %vm501, %v1954, 0.0
      %v1960 = vadd.f32 %v1958, %v1959
      %v1961 = vsel %vm501, %v1955, 0.0
      %v1962 = vadd.f32 %v1960, %v1961
      %v1963 = vrot.slane %v1962, 4
      %v1964 = vadd.f32 %v1962, %v1963
      %v1965 = vrot.slane %v1964, 2
      %v1966 = vadd.f32 %v1964, %v1965
      %v1967 = vrot.slane %v1966, 1
      %v1968 = vadd.f32 %v1966, %v1967
      %v1969 = vld [vmem:[#allocation5] sm:$0x1]
      %1971 = vset.pattern.permute.xlu0 0
      %1972 = vperm.xlu0 %1971, %v1969
      %v1973 = vpop.permute.xlu0 %1972
      %v1975 = vperm.slane %v1973, 0
      %v1976 = vadd.f32 %v1968, %v1975
      %1977 = vst.msk [vmem:[#allocation6] sm:$0x1] %vm1858, %v1976
    $region109: #{tpu_custom_call.1} parent=1 // pred_fallthru
      _
    // Predicated region
    $region110: #{tpu_custom_call.1} parent=1 // pred_check
      _
    $region111: #{tpu_custom_call.1} parent=1 // pred_check_branch
      %1979 = sbr.rel (0) target = $region113
    $region112: #{tpu_custom_call.1} parent=1 // pred_region
      %1981 = vsyncadd [#allocation7], 0
      %s1983 = sshll.u32 [#allocation6], 4
      %s1984 = int_to_ptr.vmem [resolvable:$true] %s1983
      %s1985 = sshll.u32 %s25, 4
      %s1986 = int_to_ptr.hbm [resolvable:$true] %s1985
      %1988 = dma.vmem_to_hbm [thread:$0]  %s1984, 16, %s1986, [#allocation7]
    $region113: #{tpu_custom_call.1} parent=1 // pred_fallthru
      _
    // Predicated region
    $region114: #{tpu_custom_call.1} parent=1 // pred_check
      _
    $region115: #{tpu_custom_call.1} parent=1 // pred_check_branch
      %1990 = sbr.rel (0) target = $region117
    $region116: #{tpu_custom_call.1} parent=1 // pred_region
      %1992 = dma.done [#allocation7], 16
    $region117: #{tpu_custom_call.1} parent=1 // pred_fallthru
      _
    %1993 = vsyncpa [#allocation7], 1

</llo_original>
